<compile_context>
chip_gen: v6e
topology: v6e:2x2x1
jax: 0.10.0
libtpu: 0.0.40
codegen_flags: <defaults>
</compile_context>

<pallas_src>
import numpy as np
import jax
import jax.numpy as jnp
from jax.experimental import pallas as pl
from jax.experimental.pallas import tpu as pltpu  # noqa: F401  (TPU backend)

# ---- module hyper-parameters (EncoderBlock(D, heads, p, fwd_exp)) ----
D = 32
HEADS = 4
HEAD_DIM = D // HEADS      # 8
FWD_EXP = 2
D_FF = FWD_EXP * D         # 64
EPS = 1e-5                 # nn.LayerNorm default eps

B = 2                      # batch
L = 8                      # sequence length
BL = B * L                 # 16 tokens total
HB = HEADS * B             # 8 independent (head, batch) attention problems

# Row offsets inside the packed D-wide slab  [Q residual | parameters].
_R_Q = 0                   # Q residual                 rows [0, 16)
_R_WHT = _R_Q + BL         # Wh^T                       rows [16, 48)
_R_W2T = _R_WHT + D        # W2^T                       rows [48, 112)
_R_VEC = _R_W2T + D_FF     # bh, g1, be1, b2, g2, be2   rows [112, 118)
_SLAB_DQ_ROWS = _R_VEC + 6


def _layernorm(x, gamma, beta):
    mean = jnp.mean(x, axis=-1, keepdims=True)
    var = jnp.mean((x - mean) ** 2, axis=-1, keepdims=True)
    return (x - mean) * jax.lax.rsqrt(var + EPS) * gamma + beta


def encoder_block_kernel(qkv_ref, pdq_ref, pf_ref, out_ref):
    # qkv : (3, HB, L, Hd)  stacked [ Q heads | K^T heads (Hd, L) | V heads ]
    #                       hb = h*B + b  (head-major)
    # pdq : (118, D)        [ Q residual | Wh^T | W2^T | bh,g1,be1,b2,g2,be2 ]
    # pf  : (33, D_FF)      [ W1^T | b1 ]
    scale = jnp.float32(1.0 / np.sqrt(D))   # TransGAN scales by sqrt(embed_size)
    qh = qkv_ref[0] * scale                  # (HB, L, Hd), fold scale into q once
    kT = qkv_ref[1]                          # (HB, Hd, L), pre-transposed in wrapper
    vh = qkv_ref[2]                          # (HB, L, Hd)

    # ---- attention, batched over (head, batch) -> no cross-batch mask ----
    scores = jnp.einsum('xqd,xdk->xqk', qh, kT,
                        preferred_element_type=jnp.float32)   # (HB, L, L)
    scores = scores - jnp.max(scores, axis=-1, keepdims=True)
    p = jnp.exp(scores)
    attn = p / jnp.sum(p, axis=-1, keepdims=True)              # exact divide
    ctx = jnp.einsum('xqk,xkd->xqd', attn, vh,
                     preferred_element_type=jnp.float32)       # (HB, L, Hd)

    # ---- parameters: slice the refs directly (no whole-slab materialize) ----
    whT3 = pdq_ref[_R_WHT:_R_WHT + D, :].reshape(HEADS, HEAD_DIM, D)  # (H,Hd,D)
    w2T = pdq_ref[_R_W2T:_R_W2T + D_FF, :]                            # (D_FF,D)
    bh = pdq_ref[_R_VEC + 0:_R_VEC + 1, :]
    g1 = pdq_ref[_R_VEC + 1:_R_VEC + 2, :]
    be1 = pdq_ref[_R_VEC + 2:_R_VEC + 3, :]
    b2 = pdq_ref[_R_VEC + 3:_R_VEC + 4, :]
    g2 = pdq_ref[_R_VEC + 4:_R_VEC + 5, :]
    be2 = pdq_ref[_R_VEC + 5:_R_VEC + 6, :]
    qres = pdq_ref[_R_Q:_R_Q + BL, :]                                 # (BL, D)
    w1T = pf_ref[0:D, :]                                              # (D, D_FF)
    b1 = pf_ref[D:D + 1, :]                                           # (1, D_FF)

    # ---- output projection: concat over heads == sum_h ctx_h @ Wh_block_h ----
    # (HB, L, Hd) -> (H, B*L, Hd) is a pure leading/sublane regroup; the
    # projection is one batched contraction + a leading-axis reduce (no Python
    # per-head loop, no lane-shuffle concat).
    ctx_h = ctx.reshape(HEADS, BL, HEAD_DIM)
    proj = jnp.sum(jnp.einsum('hqd,hdo->hqo', ctx_h, whT3,
                              preferred_element_type=jnp.float32),
                   axis=0) + bh                                        # (BL, D)

    # ---- residual + LayerNorm 1 (dropout = identity in eval mode) ----
    x = _layernorm(proj + qres, g1, be1)

    # ---- MLP: Linear(D, D_FF) -> ReLU -> Linear(D_FF, D) ----
    h1 = jnp.maximum(jnp.dot(x, w1T, preferred_element_type=jnp.float32) + b1,
                     0.0)
    fwd = jnp.dot(h1, w2T, preferred_element_type=jnp.float32) + b2

    # ---- residual + LayerNorm 2 (final dropout = identity in eval mode) ----
    y = _layernorm(fwd + x, g2, be2)
    out_ref[...] = y.astype(out_ref.dtype)


def pack_params(params):
    """Pack the 10 parameter tensors into 2 DMA slabs. Built ONCE per model
    (hoisted out of the per-call path), reused by every encoder_block call."""
    Wh, bh, g1, be1, W1, b1, W2, b2, g2, be2 = params
    vec = lambda a: jnp.asarray(a, jnp.float32).reshape(1, -1)
    slab_d = jnp.concatenate(
        [Wh.T, W2.T, vec(bh), vec(g1), vec(be1), vec(b2), vec(g2), vec(be2)],
        axis=0).astype(jnp.float32)                       # (102, D)
    slab_f = jnp.concatenate([W1.T, vec(b1)],
                             axis=0).astype(jnp.float32)  # (33, D_FF)
    return slab_d, slab_f


@jax.jit
def encoder_block(Q, K, V, slab_d, slab_f):
    Bsz, Lseq, Dm = Q.shape
    assert (Bsz, Lseq, Dm) == (B, L, D)
    # Shapes coincide (L == HEAD_DIM == 8), so Q-heads, K^T-heads and V-heads
    # can share a single stacked (3, HB, L, Hd) DMA.
    assert Lseq == HEAD_DIM

    def to_heads(X):
        # (B, L, D) -> (HEADS*B, L, HEAD_DIM), head-major batch layout
        return (X.reshape(Bsz, Lseq, HEADS, HEAD_DIM)
                 .transpose(2, 0, 1, 3)
                 .reshape(HEADS * Bsz, Lseq, HEAD_DIM))

    qh = to_heads(Q)
    kT = to_heads(K).transpose(0, 2, 1)     # pre-transpose K: (HB, Hd, L)
    vh = to_heads(V)
    qkv = jnp.stack([qh, kT, vh], axis=0)   # (3, HB, L, Hd)  -> one DMA

    # Q residual rides on the (hoisted) D-wide parameter slab -> one DMA.
    q_flat = Q.reshape(Bsz * Lseq, Dm).astype(jnp.float32)
    slab_dq = jnp.concatenate([q_flat, slab_d], axis=0)   # (118, D)

    # Single-step pallas_call: whole problem (~30 KiB) lives in VMEM, no grid.
    # NOTE: if many sequences / fused layers are batched per call, add a grid
    # over sequence chunks with dimension_semantics=("parallel",...) so v7x's
    # second TensorCore is used and DMA pipelines; irrelevant at this size.
    out = pl.pallas_call(
        encoder_block_kernel,
        out_shape=jax.ShapeDtypeStruct((Bsz * Lseq, Dm), Q.dtype),
    )(qkv, slab_dq, slab_f)
    return out.reshape(Bsz, Lseq, Dm)


# ---- pure-JAX reference for verification ----
def encoder_block_ref(Q, K, V, params):
    (Wh, bh, g1, be1, W1, b1, W2, b2, g2, be2) = params
    Bsz, Lseq, _ = Q.shape
    # Force full-f32 matmul precision so the reference is not the noisy side.
    with jax.default_matmul_precision("float32"):
        Qh = Q.reshape(Bsz, Lseq, HEADS, HEAD_DIM)
        Kh = K.reshape(Bsz, Lseq, HEADS, HEAD_DIM)
        Vh = V.reshape(Bsz, Lseq, HEADS, HEAD_DIM)
        scores = jnp.einsum('bqhd,bkhd->bhqk', Qh, Kh) / np.sqrt(D)
        attn = jax.nn.softmax(scores, axis=3)
        ao = jnp.einsum('bhql,blhd->bqhd', attn, Vh).reshape(Bsz, Lseq, D)
        proj = ao @ Wh.T + bh

        def ln(x, g, b):
            m = x.mean(-1, keepdims=True)
            v = ((x - m) ** 2).mean(-1, keepdims=True)
            return (x - m) / jnp.sqrt(v + EPS) * g + b

        x = ln(proj + Q, g1, be1)
        h = jnp.maximum(x @ W1.T + b1, 0.0)
        f = h @ W2.T + b2
        return ln(f + x, g2, be2)


def init_params(key):
    ks = jax.random.split(key, 10)

    def linear_w(k, out_f, in_f):
        bound = 1.0 / np.sqrt(in_f)
        return jax.random.uniform(k, (out_f, in_f), jnp.float32, -bound, bound)

    def linear_b(k, out_f, in_f):
        bound = 1.0 / np.sqrt(in_f)
        return jax.random.uniform(k, (1, out_f), jnp.float32, -bound, bound)

    Wh = linear_w(ks[0], D, D)
    bh = linear_b(ks[1], D, D)
    W1 = linear_w(ks[2], D_FF, D)
    b1 = linear_b(ks[3], D_FF, D)
    W2 = linear_w(ks[4], D, D_FF)
    b2 = linear_b(ks[5], D, D_FF)
    # LayerNorm affine params (default init ones/zeros; perturbed with
    # independent keys so gamma/beta are actually exercised and uncorrelated).
    g1 = jnp.ones((1, D), jnp.float32) + 0.01 * jax.random.normal(ks[6], (1, D))
    be1 = 0.01 * jax.random.normal(ks[7], (1, D))
    g2 = jnp.ones((1, D), jnp.float32) + 0.01 * jax.random.normal(ks[8], (1, D))
    be2 = 0.01 * jax.random.normal(ks[9], (1, D))
    return (Wh, bh, g1, be1, W1, b1, W2, b2, g2, be2)


if __name__ == "__main__":
    key = jax.random.PRNGKey(0)
    kq, kk, kv, kp = jax.random.split(key, 4)
    Q = jax.random.normal(kq, (B, L, D), jnp.float32)
    K = jax.random.normal(kk, (B, L, D), jnp.float32)
    V = jax.random.normal(kv, (B, L, D), jnp.float32)
    params = init_params(kp)
    slab_d, slab_f = pack_params(params)     # hoisted: built once, not per call

    out = jax.block_until_ready(encoder_block(Q, K, V, slab_d, slab_f))
    ref = encoder_block_ref(Q, K, V, params)
    # Exact softmax divide (approx reciprocal removed) -> tolerance tightened
    # 25x vs the previous 5e-3; remaining budget covers MXU f32 pass
    # decomposition vs the XLA highest-precision reference.
    np.testing.assert_allclose(np.asarray(out), np.asarray(ref),
                               atol=2e-4, rtol=2e-4)
    print("KERNEL_OK")
</pallas_src>

<mosaic_0001>
module attributes {stable_mosaic.version = 11 : i64} {
  func.func @encoder_block_kernel(%arg0: memref<3x8x8x8xf32, #tpu.memory_space<vmem>>, %arg1: memref<118x32xf32, #tpu.memory_space<vmem>>, %arg2: memref<33x64xf32, #tpu.memory_space<vmem>>, %arg3: memref<16x32xf32, #tpu.memory_space<vmem>>) attributes {dimension_semantics = [], scalar_prefetch = 0 : i64, scratch_operands = 0 : i64, tpu.core_type = #tpu.core_type<tc>} {
    %c0 = arith.constant 0 : index
    %c0_0 = arith.constant 0 : index
    %c0_1 = arith.constant 0 : index
    %c0_2 = arith.constant 0 : index
    %0 = vector.load %arg0[%c0, %c0_0, %c0_1, %c0_2] : memref<3x8x8x8xf32, #tpu.memory_space<vmem>>, vector<1x8x8x8xf32>
    %1 = vector.shape_cast %0 : vector<1x8x8x8xf32> to vector<8x8x8xf32>
    %cst = arith.constant 0.176776692 : f32
    %2 = vector.broadcast %cst : f32 to vector<8x8x8xf32>
    %3 = arith.mulf %1, %2 : vector<8x8x8xf32>
    %c1 = arith.constant 1 : index
    %c0_3 = arith.constant 0 : index
    %c0_4 = arith.constant 0 : index
    %c0_5 = arith.constant 0 : index
    %4 = vector.load %arg0[%c1, %c0_3, %c0_4, %c0_5] : memref<3x8x8x8xf32, #tpu.memory_space<vmem>>, vector<1x8x8x8xf32>
    %5 = vector.shape_cast %4 : vector<1x8x8x8xf32> to vector<8x8x8xf32>
    %c2 = arith.constant 2 : index
    %c0_6 = arith.constant 0 : index
    %c0_7 = arith.constant 0 : index
    %c0_8 = arith.constant 0 : index
    %6 = vector.load %arg0[%c2, %c0_6, %c0_7, %c0_8] : memref<3x8x8x8xf32, #tpu.memory_space<vmem>>, vector<1x8x8x8xf32>
    %7 = vector.shape_cast %6 : vector<1x8x8x8xf32> to vector<8x8x8xf32>
    "tpu.trace_start"() <{level = 10 : i32, message = "xqd,xdk->xqk"}> : () -> ()
    %cst_9 = arith.constant dense<0.000000e+00> : vector<8x8x8xf32>
    %8 = tpu.matmul %3, %5, %cst_9 {dimension_numbers = #tpu.dot_dimension_numbers<[2], [1], [1], [2], [0, 0, 0, 1, 1, 2], [0], [0]>} : vector<8x8x8xf32>, vector<8x8x8xf32>, vector<8x8x8xf32> -> vector<8x8x8xf32>
    "tpu.trace_stop"() : () -> ()
    %cst_10 = arith.constant dense<0xFF800000> : vector<8x8xf32>
    %9 = vector.multi_reduction <maximumf>, %8, %cst_10 [2] : vector<8x8x8xf32> to vector<8x8xf32>
    %10 = vector.shape_cast %9 : vector<8x8xf32> to vector<8x8x1xf32>
    %11 = vector.broadcast %10 : vector<8x8x1xf32> to vector<8x8x8xf32>
    %12 = arith.subf %8, %11 : vector<8x8x8xf32>
    %13 = math.exp %12 : vector<8x8x8xf32>
    %cst_11 = arith.constant dense<0.000000e+00> : vector<8x8xf32>
    %14 = vector.multi_reduction <add>, %13, %cst_11 [2] : vector<8x8x8xf32> to vector<8x8xf32>
    %15 = vector.shape_cast %14 : vector<8x8xf32> to vector<8x8x1xf32>
    %16 = vector.broadcast %15 : vector<8x8x1xf32> to vector<8x8x8xf32>
    %17 = arith.divf %13, %16 : vector<8x8x8xf32>
    "tpu.trace_start"() <{level = 10 : i32, message = "xqk,xkd->xqd"}> : () -> ()
    %cst_12 = arith.constant dense<0.000000e+00> : vector<8x8x8xf32>
    %18 = tpu.matmul %17, %7, %cst_12 {dimension_numbers = #tpu.dot_dimension_numbers<[2], [1], [1], [2], [0, 0, 0, 1, 1, 2], [0], [0]>} : vector<8x8x8xf32>, vector<8x8x8xf32>, vector<8x8x8xf32> -> vector<8x8x8xf32>
    "tpu.trace_stop"() : () -> ()
    %c16 = arith.constant 16 : index
    %c0_13 = arith.constant 0 : index
    %19 = vector.load %arg1[%c16, %c0_13] : memref<118x32xf32, #tpu.memory_space<vmem>>, vector<32x32xf32>
    %20 = vector.shape_cast %19 : vector<32x32xf32> to vector<4x8x32xf32>
    %c48 = arith.constant 48 : index
    %c0_14 = arith.constant 0 : index
    %21 = vector.load %arg1[%c48, %c0_14] : memref<118x32xf32, #tpu.memory_space<vmem>>, vector<64x32xf32>
    %c112 = arith.constant 112 : index
    %c0_15 = arith.constant 0 : index
    %22 = vector.load %arg1[%c112, %c0_15] : memref<118x32xf32, #tpu.memory_space<vmem>>, vector<1x32xf32>
    %c113 = arith.constant 113 : index
    %c0_16 = arith.constant 0 : index
    %23 = vector.load %arg1[%c113, %c0_16] : memref<118x32xf32, #tpu.memory_space<vmem>>, vector<1x32xf32>
    %c114 = arith.constant 114 : index
    %c0_17 = arith.constant 0 : index
    %24 = vector.load %arg1[%c114, %c0_17] : memref<118x32xf32, #tpu.memory_space<vmem>>, vector<1x32xf32>
    %c115 = arith.constant 115 : index
    %c0_18 = arith.constant 0 : index
    %25 = vector.load %arg1[%c115, %c0_18] : memref<118x32xf32, #tpu.memory_space<vmem>>, vector<1x32xf32>
    %c116 = arith.constant 116 : index
    %c0_19 = arith.constant 0 : index
    %26 = vector.load %arg1[%c116, %c0_19] : memref<118x32xf32, #tpu.memory_space<vmem>>, vector<1x32xf32>
    %c117 = arith.constant 117 : index
    %c0_20 = arith.constant 0 : index
    %27 = vector.load %arg1[%c117, %c0_20] : memref<118x32xf32, #tpu.memory_space<vmem>>, vector<1x32xf32>
    %c0_21 = arith.constant 0 : index
    %c0_22 = arith.constant 0 : index
    %28 = vector.load %arg1[%c0_21, %c0_22] : memref<118x32xf32, #tpu.memory_space<vmem>>, vector<16x32xf32>
    %c0_23 = arith.constant 0 : index
    %c0_24 = arith.constant 0 : index
    %29 = vector.load %arg2[%c0_23, %c0_24] : memref<33x64xf32, #tpu.memory_space<vmem>>, vector<32x64xf32>
    %c32 = arith.constant 32 : index
    %c0_25 = arith.constant 0 : index
    %30 = vector.load %arg2[%c32, %c0_25] : memref<33x64xf32, #tpu.memory_space<vmem>>, vector<1x64xf32>
    %31 = vector.shape_cast %18 : vector<8x8x8xf32> to vector<4x16x8xf32>
    "tpu.trace_start"() <{level = 10 : i32, message = "hqd,hdo->hqo"}> : () -> ()
    %cst_26 = arith.constant dense<0.000000e+00> : vector<4x16x32xf32>
    %32 = tpu.matmul %31, %20, %cst_26 {dimension_numbers = #tpu.dot_dimension_numbers<[2], [1], [1], [2], [0, 0, 0, 1, 1, 2], [0], [0]>} : vector<4x16x8xf32>, vector<4x8x32xf32>, vector<4x16x32xf32> -> vector<4x16x32xf32>
    "tpu.trace_stop"() : () -> ()
    %cst_27 = arith.constant dense<0.000000e+00> : vector<16x32xf32>
    %33 = vector.multi_reduction <add>, %32, %cst_27 [0] : vector<4x16x32xf32> to vector<16x32xf32>
    %34 = vector.broadcast %22 : vector<1x32xf32> to vector<16x32xf32>
    %35 = arith.addf %33, %34 : vector<16x32xf32>
    %36 = arith.addf %35, %28 : vector<16x32xf32>
    %cst_28 = arith.constant dense<0.000000e+00> : vector<16xf32>
    %37 = vector.multi_reduction <add>, %36, %cst_28 [1] : vector<16x32xf32> to vector<16xf32>
    %38 = vector.shape_cast %37 : vector<16xf32> to vector<16x1xf32>
    %cst_29 = arith.constant 3.200000e+01 : f32
    %39 = vector.broadcast %cst_29 : f32 to vector<16x1xf32>
    %40 = arith.divf %38, %39 : vector<16x1xf32>
    %41 = vector.broadcast %40 : vector<16x1xf32> to vector<16x32xf32>
    %42 = arith.subf %36, %41 : vector<16x32xf32>
    %43 = arith.mulf %42, %42 : vector<16x32xf32>
    %cst_30 = arith.constant dense<0.000000e+00> : vector<16xf32>
    %44 = vector.multi_reduction <add>, %43, %cst_30 [1] : vector<16x32xf32> to vector<16xf32>
    %45 = vector.shape_cast %44 : vector<16xf32> to vector<16x1xf32>
    %cst_31 = arith.constant 3.200000e+01 : f32
    %46 = vector.broadcast %cst_31 : f32 to vector<16x1xf32>
    %47 = arith.divf %45, %46 : vector<16x1xf32>
    %48 = vector.broadcast %40 : vector<16x1xf32> to vector<16x32xf32>
    %49 = arith.subf %36, %48 : vector<16x32xf32>
    %cst_32 = arith.constant 9.99999974E-6 : f32
    %50 = vector.broadcast %cst_32 : f32 to vector<16x1xf32>
    %51 = arith.addf %47, %50 : vector<16x1xf32>
    %52 = math.rsqrt %51 : vector<16x1xf32>
    %53 = vector.broadcast %52 : vector<16x1xf32> to vector<16x32xf32>
    %54 = arith.mulf %49, %53 : vector<16x32xf32>
    %55 = vector.broadcast %23 : vector<1x32xf32> to vector<16x32xf32>
    %56 = arith.mulf %54, %55 : vector<16x32xf32>
    %57 = vector.broadcast %24 : vector<1x32xf32> to vector<16x32xf32>
    %58 = arith.addf %56, %57 : vector<16x32xf32>
    %cst_33 = arith.constant dense<0.000000e+00> : vector<16x64xf32>
    %59 = tpu.matmul %58, %29, %cst_33 {dimension_numbers = #tpu.dot_dimension_numbers<[1], [0], [0], [1], [0, 0, 1, 1], [], []>} : vector<16x32xf32>, vector<32x64xf32>, vector<16x64xf32> -> vector<16x64xf32>
    %60 = vector.broadcast %30 : vector<1x64xf32> to vector<16x64xf32>
    %61 = arith.addf %59, %60 : vector<16x64xf32>
    %cst_34 = arith.constant 0.000000e+00 : f32
    %62 = vector.broadcast %cst_34 : f32 to vector<16x64xf32>
    %63 = arith.maximumf %61, %62 : vector<16x64xf32>
    %cst_35 = arith.constant dense<0.000000e+00> : vector<16x32xf32>
    %64 = tpu.matmul %63, %21, %cst_35 {dimension_numbers = #tpu.dot_dimension_numbers<[1], [0], [0], [1], [0, 0, 1, 1], [], []>} : vector<16x64xf32>, vector<64x32xf32>, vector<16x32xf32> -> vector<16x32xf32>
    %65 = vector.broadcast %25 : vector<1x32xf32> to vector<16x32xf32>
    %66 = arith.addf %64, %65 : vector<16x32xf32>
    %67 = arith.addf %66, %58 : vector<16x32xf32>
    %cst_36 = arith.constant dense<0.000000e+00> : vector<16xf32>
    %68 = vector.multi_reduction <add>, %67, %cst_36 [1] : vector<16x32xf32> to vector<16xf32>
    %69 = vector.shape_cast %68 : vector<16xf32> to vector<16x1xf32>
    %cst_37 = arith.constant 3.200000e+01 : f32
    %70 = vector.broadcast %cst_37 : f32 to vector<16x1xf32>
    %71 = arith.divf %69, %70 : vector<16x1xf32>
    %72 = vector.broadcast %71 : vector<16x1xf32> to vector<16x32xf32>
    %73 = arith.subf %67, %72 : vector<16x32xf32>
    %74 = arith.mulf %73, %73 : vector<16x32xf32>
    %cst_38 = arith.constant dense<0.000000e+00> : vector<16xf32>
    %75 = vector.multi_reduction <add>, %74, %cst_38 [1] : vector<16x32xf32> to vector<16xf32>
    %76 = vector.shape_cast %75 : vector<16xf32> to vector<16x1xf32>
    %cst_39 = arith.constant 3.200000e+01 : f32
    %77 = vector.broadcast %cst_39 : f32 to vector<16x1xf32>
    %78 = arith.divf %76, %77 : vector<16x1xf32>
    %79 = vector.broadcast %71 : vector<16x1xf32> to vector<16x32xf32>
    %80 = arith.subf %67, %79 : vector<16x32xf32>
    %cst_40 = arith.constant 9.99999974E-6 : f32
    %81 = vector.broadcast %cst_40 : f32 to vector<16x1xf32>
    %82 = arith.addf %78, %81 : vector<16x1xf32>
    %83 = math.rsqrt %82 : vector<16x1xf32>
    %84 = vector.broadcast %83 : vector<16x1xf32> to vector<16x32xf32>
    %85 = arith.mulf %80, %84 : vector<16x32xf32>
    %86 = vector.broadcast %26 : vector<1x32xf32> to vector<16x32xf32>
    %87 = arith.mulf %85, %86 : vector<16x32xf32>
    %88 = vector.broadcast %27 : vector<1x32xf32> to vector<16x32xf32>
    %89 = arith.addf %87, %88 : vector<16x32xf32>
    %c0_41 = arith.constant 0 : index
    %c0_42 = arith.constant 0 : index
    %90 = vector.load %arg3[%c0_41, %c0_42] : memref<16x32xf32, #tpu.memory_space<vmem>>, vector<16x32xf32>
    tpu.vector_store %arg3[%c0_41, %c0_42], %89 {strides = array<i32>} : memref<16x32xf32, #tpu.memory_space<vmem>>, vector<16x32xf32>,
    return
  }
}

</mosaic_0001>

<llo_original>
// kernel: encoder_block.1
$region0: #{encoder_block.1}
  #allocation0 [shape = 'u32[]', space=smem, size = 0x4, offset = 0x4, fixed_abs, tag = 'smem constant byte address 0x4 - core index']
  #allocation1 [shape = 'u32[144,128]{1,0:T(1,128)}', space=vmem, size = 0x12000, scoped, tag = 'internal scratch']
  %s0 = inlined_call_operand.vmem [shape: f32[3,8,8,8], index: 0, kind: input, shape index: {}]
  %s1 = inlined_call_operand.vmem [shape: f32[118,32], index: 1, kind: input, shape index: {}]
  %s2 = inlined_call_operand.vmem [shape: f32[33,64], index: 2, kind: input, shape index: {}]
  %s3 = inlined_call_operand.hbm [shape: f32[16,32], index: 3, kind: output, shape index: {}]
  %s4 = sld [smem:[#allocation0]]
  $region22: #{encoder_block.1} parent=0
    _
  %s6 = ssub.s32 1, %s4
  %s7 = scalar_select 0, %s6, %s4
  $region1: #{encoder_block.1} parent=0
    #allocation2 [shape = 'u8[8192]{0}', space=vmem, size = 0x2000, scoped, tag = 'output window, operand 0, single buffered']
    #allocation3 [shape = 's32[1]{0}', space=sflag, size = 0x4, scoped, tag = 'scoped memory for encoder_block.1']
    %8 = vsyncpa [#allocation3], 0
    // Predicated region
    $region2: #{encoder_block.1} parent=1 // pred_check
      _
    $region3: #{encoder_block.1} parent=1 // pred_check_branch
      %10 = sbr.rel (0) target = $region5
    $region4: #{encoder_block.1} parent=1 // pred_region
      _
    $region5: #{encoder_block.1} parent=1 // pred_fallthru
      _
    // Predicated region
    $region6: #{encoder_block.1} parent=1 // pred_check
      _
    $region7: #{encoder_block.1} parent=1 // pred_check_branch
      %12 = sbr.rel (0) target = $region9
    $region8: #{encoder_block.1} parent=1 // pred_region
      _
    $region9: #{encoder_block.1} parent=1 // pred_fallthru
      _
    // Predicated region
    $region10: #{encoder_block.1} parent=1 // pred_check
      _
    $region11: #{encoder_block.1} parent=1 // pred_check_branch
      %14 = sbr.rel (0) target = $region13
    $region12: #{encoder_block.1} parent=1 // pred_region
      _
    $region13: #{encoder_block.1} parent=1 // pred_fallthru
      _
    %v15 = vld [vmem:[%s0] sm:$0xff]
    %v16 = vld [vmem:[%s0 + $0x8] sm:$0xff]
    %v17 = vld [vmem:[%s0 + $0x10] sm:$0xff]
    %v18 = vld [vmem:[%s0 + $0x18] sm:$0xff]
    %v19 = vld [vmem:[%s0 + $0x20] sm:$0xff]
    %v20 = vld [vmem:[%s0 + $0x28] sm:$0xff]
    %v21 = vld [vmem:[%s0 + $0x30] sm:$0xff]
    %v22 = vld [vmem:[%s0 + $0x38] sm:$0xff]
    %v23 = vmul.f32 %v15, 0.17677669
    %v24 = vmul.f32 %v16, 0.17677669
    %v25 = vmul.f32 %v17, 0.17677669
    %v26 = vmul.f32 %v18, 0.17677669
    %v27 = vmul.f32 %v19, 0.17677669
    %v28 = vmul.f32 %v20, 0.17677669
    %v29 = vmul.f32 %v21, 0.17677669
    %v30 = vmul.f32 %v22, 0.17677669
    %s31 = scalar_lea.vmem %s0, 64
    %v32 = vld [vmem:[%s31] sm:$0xff]
    %v33 = vld [vmem:[%s31 + $0x8] sm:$0xff]
    %v34 = vld [vmem:[%s31 + $0x10] sm:$0xff]
    %v35 = vld [vmem:[%s31 + $0x18] sm:$0xff]
    %v36 = vld [vmem:[%s31 + $0x20] sm:$0xff]
    %v37 = vld [vmem:[%s31 + $0x28] sm:$0xff]
    %v38 = vld [vmem:[%s31 + $0x30] sm:$0xff]
    %v39 = vld [vmem:[%s31 + $0x38] sm:$0xff]
    %s40 = scalar_lea.vmem %s0, 128
    %v41 = vld [vmem:[%s40] sm:$0xff]
    %v42 = vld [vmem:[%s40 + $0x8] sm:$0xff]
    %v43 = vld [vmem:[%s40 + $0x10] sm:$0xff]
    %v44 = vld [vmem:[%s40 + $0x18] sm:$0xff]
    %v45 = vld [vmem:[%s40 + $0x20] sm:$0xff]
    %v46 = vld [vmem:[%s40 + $0x28] sm:$0xff]
    %v47 = vld [vmem:[%s40 + $0x30] sm:$0xff]
    %v48 = vld [vmem:[%s40 + $0x38] sm:$0xff]
    %vm49 = vcmask 64512
    %v51 = vsel %vm49, %v23, 0
    %53 = vmatprep.subr.mxu0 0.0
    %54 = vmatpush1.msra.mxu0 0.0
    %55 = vmatprep.subr.mxu0 0.0
    %56 = vmatpush1.msra.mxu0 0.0
    %57 = vmatprep.subr.mxu0 0.0
    %58 = vmatpush1.msra.mxu0 0.0
    %59 = vmatprep.subr.mxu0 0.0
    %60 = vmatpush1.msra.mxu0 0.0
    %61 = vmatprep.subr.mxu0 0.0
    %62 = vmatpush1.msra.mxu0 0.0
    %63 = vmatprep.subr.mxu0 0.0
    %64 = vmatpush1.msra.mxu0 0.0
    %65 = vmatprep.subr.mxu0 0.0
    %66 = vmatpush1.msra.mxu0 0.0
    %67 = vmatprep.subr.mxu0 0.0
    %68 = vmatpush1.msra.mxu0 0.0
    %69 = vmatprep.subr.mxu0 0.0
    %70 = vmatpush1.msra.mxu0 0.0
    %71 = vmatprep.subr.mxu0 0.0
    %72 = vmatpush1.msra.mxu0 0.0
    %73 = vmatprep.subr.mxu0 0.0
    %74 = vmatpush1.msra.mxu0 0.0
    %75 = vmatprep.subr.mxu0 0.0
    %76 = vmatpush1.msra.mxu0 0.0
    %77 = vmatprep.subr.mxu0 0.0
    %78 = vmatpush1.msra.mxu0 0.0
    %79 = vmatprep.subr.mxu0 0.0
    %80 = vmatpush1.msra.mxu0 0.0
    %81 = vmatprep.subr.mxu0 0.0
    %82 = vmatpush1.msra.mxu0 0.0
    %83 = vmatprep.subr.mxu0 0.0
    %84 = vmatpush1.msra.mxu0 %v32
    %85 = vmatprep.subr.mxu0 0.0
    %86 = vmatpush2.msra.mxu0 0.0
    %87 = vmatprep.subr.mxu0 0.0
    %88 = vmatpush2.msra.mxu0 0.0
    %89 = vmatprep.subr.mxu0 0.0
    %90 = vmatpush2.msra.mxu0 0.0
    %91 = vmatprep.subr.mxu0 0.0
    %92 = vmatpush2.msra.mxu0 0.0
    %93 = vmatprep.subr.mxu0 0.0
    %94 = vmatpush2.msra.mxu0 0.0
    %95 = vmatprep.subr.mxu0 0.0
    %96 = vmatpush2.msra.mxu0 0.0
    %97 = vmatprep.subr.mxu0 0.0
    %98 = vmatpush2.msra.mxu0 0.0
    %99 = vmatprep.subr.mxu0 0.0
    %100 = vmatpush2.msra.mxu0 0.0
    %101 = vmatprep.subr.mxu0 0.0
    %102 = vmatpush2.msra.mxu0 0.0
    %103 = vmatprep.subr.mxu0 0.0
    %104 = vmatpush2.msra.mxu0 0.0
    %105 = vmatprep.subr.mxu0 0.0
    %106 = vmatpush2.msra.mxu0 0.0
    %107 = vmatprep.subr.mxu0 0.0
    %108 = vmatpush2.msra.mxu0 0.0
    %109 = vmatprep.subr.mxu0 0.0
    %110 = vmatpush2.msra.mxu0 0.0
    %111 = vmatprep.subr.mxu0 0.0
    %112 = vmatpush2.msra.mxu0 0.0
    %113 = vmatprep.subr.mxu0 0.0
    %114 = vmatpush2.msra.mxu0 0.0
    %115 = vmatprep.subr.mxu0 0.0
    %116 = vmatpush2.msra.mxu0 0.0
    %117 = vmatprep.mubr.f32.mxu0 0.0
    %118 = vmatmul.mubr.f32.gmra.mxu0 %v51
    %v119 = vpop.f32.mrf.mxu0
    %v120 = vadd.f32 0.0, %v119
    %v121 = vpop.f32.mrf.mxu0
    %122 = vdwg.mxu0
    %v124 = vsel %vm49, %v24, 0
    %126 = vmatprep.subr.mxu0 0.0
    %127 = vmatpush1.msra.mxu0 0.0
    %128 = vmatprep.subr.mxu0 0.0
    %129 = vmatpush1.msra.mxu0 0.0
    %130 = vmatprep.subr.mxu0 0.0
    %131 = vmatpush1.msra.mxu0 0.0
    %132 = vmatprep.subr.mxu0 0.0
    %133 = vmatpush1.msra.mxu0 0.0
    %134 = vmatprep.subr.mxu0 0.0
    %135 = vmatpush1.msra.mxu0 0.0
    %136 = vmatprep.subr.mxu0 0.0
    %137 = vmatpush1.msra.mxu0 0.0
    %138 = vmatprep.subr.mxu0 0.0
    %139 = vmatpush1.msra.mxu0 0.0
    %140 = vmatprep.subr.mxu0 0.0
    %141 = vmatpush1.msra.mxu0 0.0
    %142 = vmatprep.subr.mxu0 0.0
    %143 = vmatpush1.msra.mxu0 0.0
    %144 = vmatprep.subr.mxu0 0.0
    %145 = vmatpush1.msra.mxu0 0.0
    %146 = vmatprep.subr.mxu0 0.0
    %147 = vmatpush1.msra.mxu0 0.0
    %148 = vmatprep.subr.mxu0 0.0
    %149 = vmatpush1.msra.mxu0 0.0
    %150 = vmatprep.subr.mxu0 0.0
    %151 = vmatpush1.msra.mxu0 0.0
    %152 = vmatprep.subr.mxu0 0.0
    %153 = vmatpush1.msra.mxu0 0.0
    %154 = vmatprep.subr.mxu0 0.0
    %155 = vmatpush1.msra.mxu0 0.0
    %156 = vmatprep.subr.mxu0 0.0
    %157 = vmatpush1.msra.mxu0 %v33
    %158 = vmatprep.subr.mxu0 0.0
    %159 = vmatpush2.msra.mxu0 0.0
    %160 = vmatprep.subr.mxu0 0.0
    %161 = vmatpush2.msra.mxu0 0.0
    %162 = vmatprep.subr.mxu0 0.0
    %163 = vmatpush2.msra.mxu0 0.0
    %164 = vmatprep.subr.mxu0 0.0
    %165 = vmatpush2.msra.mxu0 0.0
    %166 = vmatprep.subr.mxu0 0.0
    %167 = vmatpush2.msra.mxu0 0.0
    %168 = vmatprep.subr.mxu0 0.0
    %169 = vmatpush2.msra.mxu0 0.0
    %170 = vmatprep.subr.mxu0 0.0
    %171 = vmatpush2.msra.mxu0 0.0
    %172 = vmatprep.subr.mxu0 0.0
    %173 = vmatpush2.msra.mxu0 0.0
    %174 = vmatprep.subr.mxu0 0.0
    %175 = vmatpush2.msra.mxu0 0.0
    %176 = vmatprep.subr.mxu0 0.0
    %177 = vmatpush2.msra.mxu0 0.0
    %178 = vmatprep.subr.mxu0 0.0
    %179 = vmatpush2.msra.mxu0 0.0
    %180 = vmatprep.subr.mxu0 0.0
    %181 = vmatpush2.msra.mxu0 0.0
    %182 = vmatprep.subr.mxu0 0.0
    %183 = vmatpush2.msra.mxu0 0.0
    %184 = vmatprep.subr.mxu0 0.0
    %185 = vmatpush2.msra.mxu0 0.0
    %186 = vmatprep.subr.mxu0 0.0
    %187 = vmatpush2.msra.mxu0 0.0
    %188 = vmatprep.subr.mxu0 0.0
    %189 = vmatpush2.msra.mxu0 0.0
    %190 = vmatprep.mubr.f32.mxu0 0.0
    %191 = vmatmul.mubr.f32.gmra.mxu0 %v124
    %v192 = vpop.f32.mrf.mxu0
    %v193 = vadd.f32 0.0, %v192
    %v194 = vpop.f32.mrf.mxu0
    %195 = vdwg.mxu0
    %v197 = vsel %vm49, %v25, 0
    %199 = vmatprep.subr.mxu0 0.0
    %200 = vmatpush1.msra.mxu0 0.0
    %201 = vmatprep.subr.mxu0 0.0
    %202 = vmatpush1.msra.mxu0 0.0
    %203 = vmatprep.subr.mxu0 0.0
    %204 = vmatpush1.msra.mxu0 0.0
    %205 = vmatprep.subr.mxu0 0.0
    %206 = vmatpush1.msra.mxu0 0.0
    %207 = vmatprep.subr.mxu0 0.0
    %208 = vmatpush1.msra.mxu0 0.0
    %209 = vmatprep.subr.mxu0 0.0
    %210 = vmatpush1.msra.mxu0 0.0
    %211 = vmatprep.subr.mxu0 0.0
    %212 = vmatpush1.msra.mxu0 0.0
    %213 = vmatprep.subr.mxu0 0.0
    %214 = vmatpush1.msra.mxu0 0.0
    %215 = vmatprep.subr.mxu0 0.0
    %216 = vmatpush1.msra.mxu0 0.0
    %217 = vmatprep.subr.mxu0 0.0
    %218 = vmatpush1.msra.mxu0 0.0
    %219 = vmatprep.subr.mxu0 0.0
    %220 = vmatpush1.msra.mxu0 0.0
    %221 = vmatprep.subr.mxu0 0.0
    %222 = vmatpush1.msra.mxu0 0.0
    %223 = vmatprep.subr.mxu0 0.0
    %224 = vmatpush1.msra.mxu0 0.0
    %225 = vmatprep.subr.mxu0 0.0
    %226 = vmatpush1.msra.mxu0 0.0
    %227 = vmatprep.subr.mxu0 0.0
    %228 = vmatpush1.msra.mxu0 0.0
    %229 = vmatprep.subr.mxu0 0.0
    %230 = vmatpush1.msra.mxu0 %v34
    %231 = vmatprep.subr.mxu0 0.0
    %232 = vmatpush2.msra.mxu0 0.0
    %233 = vmatprep.subr.mxu0 0.0
    %234 = vmatpush2.msra.mxu0 0.0
    %235 = vmatprep.subr.mxu0 0.0
    %236 = vmatpush2.msra.mxu0 0.0
    %237 = vmatprep.subr.mxu0 0.0
    %238 = vmatpush2.msra.mxu0 0.0
    %239 = vmatprep.subr.mxu0 0.0
    %240 = vmatpush2.msra.mxu0 0.0
    %241 = vmatprep.subr.mxu0 0.0
    %242 = vmatpush2.msra.mxu0 0.0
    %243 = vmatprep.subr.mxu0 0.0
    %244 = vmatpush2.msra.mxu0 0.0
    %245 = vmatprep.subr.mxu0 0.0
    %246 = vmatpush2.msra.mxu0 0.0
    %247 = vmatprep.subr.mxu0 0.0
    %248 = vmatpush2.msra.mxu0 0.0
    %249 = vmatprep.subr.mxu0 0.0
    %250 = vmatpush2.msra.mxu0 0.0
    %251 = vmatprep.subr.mxu0 0.0
    %252 = vmatpush2.msra.mxu0 0.0
    %253 = vmatprep.subr.mxu0 0.0
    %254 = vmatpush2.msra.mxu0 0.0
    %255 = vmatprep.subr.mxu0 0.0
    %256 = vmatpush2.msra.mxu0 0.0
    %257 = vmatprep.subr.mxu0 0.0
    %258 = vmatpush2.msra.mxu0 0.0
    %259 = vmatprep.subr.mxu0 0.0
    %260 = vmatpush2.msra.mxu0 0.0
    %261 = vmatprep.subr.mxu0 0.0
    %262 = vmatpush2.msra.mxu0 0.0
    %263 = vmatprep.mubr.f32.mxu0 0.0
    %264 = vmatmul.mubr.f32.gmra.mxu0 %v197
    %v265 = vpop.f32.mrf.mxu0
    %v266 = vadd.f32 0.0, %v265
    %v267 = vpop.f32.mrf.mxu0
    %268 = vdwg.mxu0
    %v270 = vsel %vm49, %v26, 0
    %272 = vmatprep.subr.mxu0 0.0
    %273 = vmatpush1.msra.mxu0 0.0
    %274 = vmatprep.subr.mxu0 0.0
    %275 = vmatpush1.msra.mxu0 0.0
    %276 = vmatprep.subr.mxu0 0.0
    %277 = vmatpush1.msra.mxu0 0.0
    %278 = vmatprep.subr.mxu0 0.0
    %279 = vmatpush1.msra.mxu0 0.0
    %280 = vmatprep.subr.mxu0 0.0
    %281 = vmatpush1.msra.mxu0 0.0
    %282 = vmatprep.subr.mxu0 0.0
    %283 = vmatpush1.msra.mxu0 0.0
    %284 = vmatprep.subr.mxu0 0.0
    %285 = vmatpush1.msra.mxu0 0.0
    %286 = vmatprep.subr.mxu0 0.0
    %287 = vmatpush1.msra.mxu0 0.0
    %288 = vmatprep.subr.mxu0 0.0
    %289 = vmatpush1.msra.mxu0 0.0
    %290 = vmatprep.subr.mxu0 0.0
    %291 = vmatpush1.msra.mxu0 0.0
    %292 = vmatprep.subr.mxu0 0.0
    %293 = vmatpush1.msra.mxu0 0.0
    %294 = vmatprep.subr.mxu0 0.0
    %295 = vmatpush1.msra.mxu0 0.0
    %296 = vmatprep.subr.mxu0 0.0
    %297 = vmatpush1.msra.mxu0 0.0
    %298 = vmatprep.subr.mxu0 0.0
    %299 = vmatpush1.msra.mxu0 0.0
    %300 = vmatprep.subr.mxu0 0.0
    %301 = vmatpush1.msra.mxu0 0.0
    %302 = vmatprep.subr.mxu0 0.0
    %303 = vmatpush1.msra.mxu0 %v35
    %304 = vmatprep.subr.mxu0 0.0
    %305 = vmatpush2.msra.mxu0 0.0
    %306 = vmatprep.subr.mxu0 0.0
    %307 = vmatpush2.msra.mxu0 0.0
    %308 = vmatprep.subr.mxu0 0.0
    %309 = vmatpush2.msra.mxu0 0.0
    %310 = vmatprep.subr.mxu0 0.0
    %311 = vmatpush2.msra.mxu0 0.0
    %312 = vmatprep.subr.mxu0 0.0
    %313 = vmatpush2.msra.mxu0 0.0
    %314 = vmatprep.subr.mxu0 0.0
    %315 = vmatpush2.msra.mxu0 0.0
    %316 = vmatprep.subr.mxu0 0.0
    %317 = vmatpush2.msra.mxu0 0.0
    %318 = vmatprep.subr.mxu0 0.0
    %319 = vmatpush2.msra.mxu0 0.0
    %320 = vmatprep.subr.mxu0 0.0
    %321 = vmatpush2.msra.mxu0 0.0
    %322 = vmatprep.subr.mxu0 0.0
    %323 = vmatpush2.msra.mxu0 0.0
    %324 = vmatprep.subr.mxu0 0.0
    %325 = vmatpush2.msra.mxu0 0.0
    %326 = vmatprep.subr.mxu0 0.0
    %327 = vmatpush2.msra.mxu0 0.0
    %328 = vmatprep.subr.mxu0 0.0
    %329 = vmatpush2.msra.mxu0 0.0
    %330 = vmatprep.subr.mxu0 0.0
    %331 = vmatpush2.msra.mxu0 0.0
    %332 = vmatprep.subr.mxu0 0.0
    %333 = vmatpush2.msra.mxu0 0.0
    %334 = vmatprep.subr.mxu0 0.0
    %335 = vmatpush2.msra.mxu0 0.0
    %336 = vmatprep.mubr.f32.mxu0 0.0
    %337 = vmatmul.mubr.f32.gmra.mxu0 %v270
    %v338 = vpop.f32.mrf.mxu0
    %v339 = vadd.f32 0.0, %v338
    %v340 = vpop.f32.mrf.mxu0
    %341 = vdwg.mxu0
    %v343 = vsel %vm49, %v27, 0
    %345 = vmatprep.subr.mxu0 0.0
    %346 = vmatpush1.msra.mxu0 0.0
    %347 = vmatprep.subr.mxu0 0.0
    %348 = vmatpush1.msra.mxu0 0.0
    %349 = vmatprep.subr.mxu0 0.0
    %350 = vmatpush1.msra.mxu0 0.0
    %351 = vmatprep.subr.mxu0 0.0
    %352 = vmatpush1.msra.mxu0 0.0
    %353 = vmatprep.subr.mxu0 0.0
    %354 = vmatpush1.msra.mxu0 0.0
    %355 = vmatprep.subr.mxu0 0.0
    %356 = vmatpush1.msra.mxu0 0.0
    %357 = vmatprep.subr.mxu0 0.0
    %358 = vmatpush1.msra.mxu0 0.0
    %359 = vmatprep.subr.mxu0 0.0
    %360 = vmatpush1.msra.mxu0 0.0
    %361 = vmatprep.subr.mxu0 0.0
    %362 = vmatpush1.msra.mxu0 0.0
    %363 = vmatprep.subr.mxu0 0.0
    %364 = vmatpush1.msra.mxu0 0.0
    %365 = vmatprep.subr.mxu0 0.0
    %366 = vmatpush1.msra.mxu0 0.0
    %367 = vmatprep.subr.mxu0 0.0
    %368 = vmatpush1.msra.mxu0 0.0
    %369 = vmatprep.subr.mxu0 0.0
    %370 = vmatpush1.msra.mxu0 0.0
    %371 = vmatprep.subr.mxu0 0.0
    %372 = vmatpush1.msra.mxu0 0.0
    %373 = vmatprep.subr.mxu0 0.0
    %374 = vmatpush1.msra.mxu0 0.0
    %375 = vmatprep.subr.mxu0 0.0
    %376 = vmatpush1.msra.mxu0 %v36
    %377 = vmatprep.subr.mxu0 0.0
    %378 = vmatpush2.msra.mxu0 0.0
    %379 = vmatprep.subr.mxu0 0.0
    %380 = vmatpush2.msra.mxu0 0.0
    %381 = vmatprep.subr.mxu0 0.0
    %382 = vmatpush2.msra.mxu0 0.0
    %383 = vmatprep.subr.mxu0 0.0
    %384 = vmatpush2.msra.mxu0 0.0
    %385 = vmatprep.subr.mxu0 0.0
    %386 = vmatpush2.msra.mxu0 0.0
    %387 = vmatprep.subr.mxu0 0.0
    %388 = vmatpush2.msra.mxu0 0.0
    %389 = vmatprep.subr.mxu0 0.0
    %390 = vmatpush2.msra.mxu0 0.0
    %391 = vmatprep.subr.mxu0 0.0
    %392 = vmatpush2.msra.mxu0 0.0
    %393 = vmatprep.subr.mxu0 0.0
    %394 = vmatpush2.msra.mxu0 0.0
    %395 = vmatprep.subr.mxu0 0.0
    %396 = vmatpush2.msra.mxu0 0.0
    %397 = vmatprep.subr.mxu0 0.0
    %398 = vmatpush2.msra.mxu0 0.0
    %399 = vmatprep.subr.mxu0 0.0
    %400 = vmatpush2.msra.mxu0 0.0
    %401 = vmatprep.subr.mxu0 0.0
    %402 = vmatpush2.msra.mxu0 0.0
    %403 = vmatprep.subr.mxu0 0.0
    %404 = vmatpush2.msra.mxu0 0.0
    %405 = vmatprep.subr.mxu0 0.0
    %406 = vmatpush2.msra.mxu0 0.0
    %407 = vmatprep.subr.mxu0 0.0
    %408 = vmatpush2.msra.mxu0 0.0
    %409 = vmatprep.mubr.f32.mxu0 0.0
    %410 = vmatmul.mubr.f32.gmra.mxu0 %v343
    %v411 = vpop.f32.mrf.mxu0
    %v412 = vadd.f32 0.0, %v411
    %v413 = vpop.f32.mrf.mxu0
    %414 = vdwg.mxu0
    %v416 = vsel %vm49, %v28, 0
    %418 = vmatprep.subr.mxu0 0.0
    %419 = vmatpush1.msra.mxu0 0.0
    %420 = vmatprep.subr.mxu0 0.0
    %421 = vmatpush1.msra.mxu0 0.0
    %422 = vmatprep.subr.mxu0 0.0
    %423 = vmatpush1.msra.mxu0 0.0
    %424 = vmatprep.subr.mxu0 0.0
    %425 = vmatpush1.msra.mxu0 0.0
    %426 = vmatprep.subr.mxu0 0.0
    %427 = vmatpush1.msra.mxu0 0.0
    %428 = vmatprep.subr.mxu0 0.0
    %429 = vmatpush1.msra.mxu0 0.0
    %430 = vmatprep.subr.mxu0 0.0
    %431 = vmatpush1.msra.mxu0 0.0
    %432 = vmatprep.subr.mxu0 0.0
    %433 = vmatpush1.msra.mxu0 0.0
    %434 = vmatprep.subr.mxu0 0.0
    %435 = vmatpush1.msra.mxu0 0.0
    %436 = vmatprep.subr.mxu0 0.0
    %437 = vmatpush1.msra.mxu0 0.0
    %438 = vmatprep.subr.mxu0 0.0
    %439 = vmatpush1.msra.mxu0 0.0
    %440 = vmatprep.subr.mxu0 0.0
    %441 = vmatpush1.msra.mxu0 0.0
    %442 = vmatprep.subr.mxu0 0.0
    %443 = vmatpush1.msra.mxu0 0.0
    %444 = vmatprep.subr.mxu0 0.0
    %445 = vmatpush1.msra.mxu0 0.0
    %446 = vmatprep.subr.mxu0 0.0
    %447 = vmatpush1.msra.mxu0 0.0
    %448 = vmatprep.subr.mxu0 0.0
    %449 = vmatpush1.msra.mxu0 %v37
    %450 = vmatprep.subr.mxu0 0.0
    %451 = vmatpush2.msra.mxu0 0.0
    %452 = vmatprep.subr.mxu0 0.0
    %453 = vmatpush2.msra.mxu0 0.0
    %454 = vmatprep.subr.mxu0 0.0
    %455 = vmatpush2.msra.mxu0 0.0
    %456 = vmatprep.subr.mxu0 0.0
    %457 = vmatpush2.msra.mxu0 0.0
    %458 = vmatprep.subr.mxu0 0.0
    %459 = vmatpush2.msra.mxu0 0.0
    %460 = vmatprep.subr.mxu0 0.0
    %461 = vmatpush2.msra.mxu0 0.0
    %462 = vmatprep.subr.mxu0 0.0
    %463 = vmatpush2.msra.mxu0 0.0
    %464 = vmatprep.subr.mxu0 0.0
    %465 = vmatpush2.msra.mxu0 0.0
    %466 = vmatprep.subr.mxu0 0.0
    %467 = vmatpush2.msra.mxu0 0.0
    %468 = vmatprep.subr.mxu0 0.0
    %469 = vmatpush2.msra.mxu0 0.0
    %470 = vmatprep.subr.mxu0 0.0
    %471 = vmatpush2.msra.mxu0 0.0
    %472 = vmatprep.subr.mxu0 0.0
    %473 = vmatpush2.msra.mxu0 0.0
    %474 = vmatprep.subr.mxu0 0.0
    %475 = vmatpush2.msra.mxu0 0.0
    %476 = vmatprep.subr.mxu0 0.0
    %477 = vmatpush2.msra.mxu0 0.0
    %478 = vmatprep.subr.mxu0 0.0
    %479 = vmatpush2.msra.mxu0 0.0
    %480 = vmatprep.subr.mxu0 0.0
    %481 = vmatpush2.msra.mxu0 0.0
    %482 = vmatprep.mubr.f32.mxu0 0.0
    %483 = vmatmul.mubr.f32.gmra.mxu0 %v416
    %v484 = vpop.f32.mrf.mxu0
    %v485 = vadd.f32 0.0, %v484
    %v486 = vpop.f32.mrf.mxu0
    %487 = vdwg.mxu0
    %v489 = vsel %vm49, %v29, 0
    %491 = vmatprep.subr.mxu0 0.0
    %492 = vmatpush1.msra.mxu0 0.0
    %493 = vmatprep.subr.mxu0 0.0
    %494 = vmatpush1.msra.mxu0 0.0
    %495 = vmatprep.subr.mxu0 0.0
    %496 = vmatpush1.msra.mxu0 0.0
    %497 = vmatprep.subr.mxu0 0.0
    %498 = vmatpush1.msra.mxu0 0.0
    %499 = vmatprep.subr.mxu0 0.0
    %500 = vmatpush1.msra.mxu0 0.0
    %501 = vmatprep.subr.mxu0 0.0
    %502 = vmatpush1.msra.mxu0 0.0
    %503 = vmatprep.subr.mxu0 0.0
    %504 = vmatpush1.msra.mxu0 0.0
    %505 = vmatprep.subr.mxu0 0.0
    %506 = vmatpush1.msra.mxu0 0.0
    %507 = vmatprep.subr.mxu0 0.0
    %508 = vmatpush1.msra.mxu0 0.0
    %509 = vmatprep.subr.mxu0 0.0
    %510 = vmatpush1.msra.mxu0 0.0
    %511 = vmatprep.subr.mxu0 0.0
    %512 = vmatpush1.msra.mxu0 0.0
    %513 = vmatprep.subr.mxu0 0.0
    %514 = vmatpush1.msra.mxu0 0.0
    %515 = vmatprep.subr.mxu0 0.0
    %516 = vmatpush1.msra.mxu0 0.0
    %517 = vmatprep.subr.mxu0 0.0
    %518 = vmatpush1.msra.mxu0 0.0
    %519 = vmatprep.subr.mxu0 0.0
    %520 = vmatpush1.msra.mxu0 0.0
    %521 = vmatprep.subr.mxu0 0.0
    %522 = vmatpush1.msra.mxu0 %v38
    %523 = vmatprep.subr.mxu0 0.0
    %524 = vmatpush2.msra.mxu0 0.0
    %525 = vmatprep.subr.mxu0 0.0
    %526 = vmatpush2.msra.mxu0 0.0
    %527 = vmatprep.subr.mxu0 0.0
    %528 = vmatpush2.msra.mxu0 0.0
    %529 = vmatprep.subr.mxu0 0.0
    %530 = vmatpush2.msra.mxu0 0.0
    %531 = vmatprep.subr.mxu0 0.0
    %532 = vmatpush2.msra.mxu0 0.0
    %533 = vmatprep.subr.mxu0 0.0
    %534 = vmatpush2.msra.mxu0 0.0
    %535 = vmatprep.subr.mxu0 0.0
    %536 = vmatpush2.msra.mxu0 0.0
    %537 = vmatprep.subr.mxu0 0.0
    %538 = vmatpush2.msra.mxu0 0.0
    %539 = vmatprep.subr.mxu0 0.0
    %540 = vmatpush2.msra.mxu0 0.0
    %541 = vmatprep.subr.mxu0 0.0
    %542 = vmatpush2.msra.mxu0 0.0
    %543 = vmatprep.subr.mxu0 0.0
    %544 = vmatpush2.msra.mxu0 0.0
    %545 = vmatprep.subr.mxu0 0.0
    %546 = vmatpush2.msra.mxu0 0.0
    %547 = vmatprep.subr.mxu0 0.0
    %548 = vmatpush2.msra.mxu0 0.0
    %549 = vmatprep.subr.mxu0 0.0
    %550 = vmatpush2.msra.mxu0 0.0
    %551 = vmatprep.subr.mxu0 0.0
    %552 = vmatpush2.msra.mxu0 0.0
    %553 = vmatprep.subr.mxu0 0.0
    %554 = vmatpush2.msra.mxu0 0.0
    %555 = vmatprep.mubr.f32.mxu0 0.0
    %556 = vmatmul.mubr.f32.gmra.mxu0 %v489
    %v557 = vpop.f32.mrf.mxu0
    %v558 = vadd.f32 0.0, %v557
    %v559 = vpop.f32.mrf.mxu0
    %560 = vdwg.mxu0
    %v562 = vsel %vm49, %v30, 0
    %564 = vmatprep.subr.mxu0 0.0
    %565 = vmatpush1.msra.mxu0 0.0
    %566 = vmatprep.subr.mxu0 0.0
    %567 = vmatpush1.msra.mxu0 0.0
    %568 = vmatprep.subr.mxu0 0.0
    %569 = vmatpush1.msra.mxu0 0.0
    %570 = vmatprep.subr.mxu0 0.0
    %571 = vmatpush1.msra.mxu0 0.0
    %572 = vmatprep.subr.mxu0 0.0
    %573 = vmatpush1.msra.mxu0 0.0
    %574 = vmatprep.subr.mxu0 0.0
    %575 = vmatpush1.msra.mxu0 0.0
    %576 = vmatprep.subr.mxu0 0.0
    %577 = vmatpush1.msra.mxu0 0.0
    %578 = vmatprep.subr.mxu0 0.0
    %579 = vmatpush1.msra.mxu0 0.0
    %580 = vmatprep.subr.mxu0 0.0
    %581 = vmatpush1.msra.mxu0 0.0
    %582 = vmatprep.subr.mxu0 0.0
    %583 = vmatpush1.msra.mxu0 0.0
    %584 = vmatprep.subr.mxu0 0.0
    %585 = vmatpush1.msra.mxu0 0.0
    %586 = vmatprep.subr.mxu0 0.0
    %587 = vmatpush1.msra.mxu0 0.0
    %588 = vmatprep.subr.mxu0 0.0
    %589 = vmatpush1.msra.mxu0 0.0
    %590 = vmatprep.subr.mxu0 0.0
    %591 = vmatpush1.msra.mxu0 0.0
    %592 = vmatprep.subr.mxu0 0.0
    %593 = vmatpush1.msra.mxu0 0.0
    %594 = vmatprep.subr.mxu0 0.0
    %595 = vmatpush1.msra.mxu0 %v39
    %596 = vmatprep.subr.mxu0 0.0
    %597 = vmatpush2.msra.mxu0 0.0
    %598 = vmatprep.subr.mxu0 0.0
    %599 = vmatpush2.msra.mxu0 0.0
    %600 = vmatprep.subr.mxu0 0.0
    %601 = vmatpush2.msra.mxu0 0.0
    %602 = vmatprep.subr.mxu0 0.0
    %603 = vmatpush2.msra.mxu0 0.0
    %604 = vmatprep.subr.mxu0 0.0
    %605 = vmatpush2.msra.mxu0 0.0
    %606 = vmatprep.subr.mxu0 0.0
    %607 = vmatpush2.msra.mxu0 0.0
    %608 = vmatprep.subr.mxu0 0.0
    %609 = vmatpush2.msra.mxu0 0.0
    %610 = vmatprep.subr.mxu0 0.0
    %611 = vmatpush2.msra.mxu0 0.0
    %612 = vmatprep.subr.mxu0 0.0
    %613 = vmatpush2.msra.mxu0 0.0
    %614 = vmatprep.subr.mxu0 0.0
    %615 = vmatpush2.msra.mxu0 0.0
    %616 = vmatprep.subr.mxu0 0.0
    %617 = vmatpush2.msra.mxu0 0.0
    %618 = vmatprep.subr.mxu0 0.0
    %619 = vmatpush2.msra.mxu0 0.0
    %620 = vmatprep.subr.mxu0 0.0
    %621 = vmatpush2.msra.mxu0 0.0
    %622 = vmatprep.subr.mxu0 0.0
    %623 = vmatpush2.msra.mxu0 0.0
    %624 = vmatprep.subr.mxu0 0.0
    %625 = vmatpush2.msra.mxu0 0.0
    %626 = vmatprep.subr.mxu0 0.0
    %627 = vmatpush2.msra.mxu0 0.0
    %628 = vmatprep.mubr.f32.mxu0 0.0
    %629 = vmatmul.mubr.f32.gmra.mxu0 %v562
    %v630 = vpop.f32.mrf.mxu0
    %v631 = vadd.f32 0.0, %v630
    %v632 = vpop.f32.mrf.mxu0
    %633 = vdwg.mxu0
    %v634 = vsel %vm49, %v120, -inf
    %635 = vmax.xlane.f32.xlu0 %v634
    %v636 = vpop.xlane.xlu0 %635
    %v637 = vsel %vm49, %v193, -inf
    %638 = vmax.xlane.f32.xlu0 %v637
    %v639 = vpop.xlane.xlu0 %638
    %v640 = vsel %vm49, %v266, -inf
    %641 = vmax.xlane.f32.xlu0 %v640
    %v642 = vpop.xlane.xlu0 %641
    %v643 = vsel %vm49, %v339, -inf
    %644 = vmax.xlane.f32.xlu0 %v643
    %v645 = vpop.xlane.xlu0 %644
    %v646 = vsel %vm49, %v412, -inf
    %647 = vmax.xlane.f32.xlu0 %v646
    %v648 = vpop.xlane.xlu0 %647
    %v649 = vsel %vm49, %v485, -inf
    %650 = vmax.xlane.f32.xlu0 %v649
    %v651 = vpop.xlane.xlu0 %650
    %v652 = vsel %vm49, %v558, -inf
    %653 = vmax.xlane.f32.xlu0 %v652
    %v654 = vpop.xlane.xlu0 %653
    %v655 = vsel %vm49, %v631, -inf
    %656 = vmax.xlane.f32.xlu0 %v655
    %v657 = vpop.xlane.xlu0 %656
    %v658 = vsub.f32 %v120, %v636
    %v659 = vsub.f32 %v193, %v639
    %v660 = vsub.f32 %v266, %v642
    %v661 = vsub.f32 %v339, %v645
    %v662 = vsub.f32 %v412, %v648
    %v663 = vsub.f32 %v485, %v651
    %v664 = vsub.f32 %v558, %v654
    %v665 = vsub.f32 %v631, %v657
    %v666 = vmul.f32 %v658, 1.442695
    %v667 = vpow.pop %v666
    %v668 = vmul.f32 %v659, 1.442695
    %v669 = vpow.pop %v668
    %v670 = vmul.f32 %v660, 1.442695
    %v671 = vpow.pop %v670
    %v672 = vmul.f32 %v661, 1.442695
    %v673 = vpow.pop %v672
    %v674 = vmul.f32 %v662, 1.442695
    %v675 = vpow.pop %v674
    %v676 = vmul.f32 %v663, 1.442695
    %v677 = vpow.pop %v676
    %v678 = vmul.f32 %v664, 1.442695
    %v679 = vpow.pop %v678
    %v680 = vmul.f32 %v665, 1.442695
    %v681 = vpow.pop %v680
    %v682 = vsel %vm49, %v667, 0.0
    %683 = vadd.xlane.f32.xlu0 %v682
    %v684 = vpop.xlane.xlu0 %683
    %v685 = vsel %vm49, %v669, 0.0
    %686 = vadd.xlane.f32.xlu0 %v685
    %v687 = vpop.xlane.xlu0 %686
    %v688 = vsel %vm49, %v671, 0.0
    %689 = vadd.xlane.f32.xlu0 %v688
    %v690 = vpop.xlane.xlu0 %689
    %v691 = vsel %vm49, %v673, 0.0
    %692 = vadd.xlane.f32.xlu0 %v691
    %v693 = vpop.xlane.xlu0 %692
    %v694 = vsel %vm49, %v675, 0.0
    %695 = vadd.xlane.f32.xlu0 %v694
    %v696 = vpop.xlane.xlu0 %695
    %v697 = vsel %vm49, %v677, 0.0
    %698 = vadd.xlane.f32.xlu0 %v697
    %v699 = vpop.xlane.xlu0 %698
    %v700 = vsel %vm49, %v679, 0.0
    %701 = vadd.xlane.f32.xlu0 %v700
    %v702 = vpop.xlane.xlu0 %701
    %v703 = vsel %vm49, %v681, 0.0
    %704 = vadd.xlane.f32.xlu0 %v703
    %v705 = vpop.xlane.xlu0 %704
    %v706 = vrcp.pop %v684
    %v707 = vmul.f32 %v667, %v706
    %v708 = vrcp.pop %v687
    %v709 = vmul.f32 %v669, %v708
    %v710 = vrcp.pop %v690
    %v711 = vmul.f32 %v671, %v710
    %v712 = vrcp.pop %v693
    %v713 = vmul.f32 %v673, %v712
    %v714 = vrcp.pop %v696
    %v715 = vmul.f32 %v675, %v714
    %v716 = vrcp.pop %v699
    %v717 = vmul.f32 %v677, %v716
    %v718 = vrcp.pop %v702
    %v719 = vmul.f32 %v679, %v718
    %v720 = vrcp.pop %v705
    %v721 = vmul.f32 %v681, %v720
    %v723 = vsel %vm49, %v707, 0
    %725 = vmatprep.subr.mxu0 0.0
    %726 = vmatpush1.msra.mxu0 0.0
    %727 = vmatprep.subr.mxu0 0.0
    %728 = vmatpush1.msra.mxu0 0.0
    %729 = vmatprep.subr.mxu0 0.0
    %730 = vmatpush1.msra.mxu0 0.0
    %731 = vmatprep.subr.mxu0 0.0
    %732 = vmatpush1.msra.mxu0 0.0
    %733 = vmatprep.subr.mxu0 0.0
    %734 = vmatpush1.msra.mxu0 0.0
    %735 = vmatprep.subr.mxu0 0.0
    %736 = vmatpush1.msra.mxu0 0.0
    %737 = vmatprep.subr.mxu0 0.0
    %738 = vmatpush1.msra.mxu0 0.0
    %739 = vmatprep.subr.mxu0 0.0
    %740 = vmatpush1.msra.mxu0 0.0
    %741 = vmatprep.subr.mxu0 0.0
    %742 = vmatpush1.msra.mxu0 0.0
    %743 = vmatprep.subr.mxu0 0.0
    %744 = vmatpush1.msra.mxu0 0.0
    %745 = vmatprep.subr.mxu0 0.0
    %746 = vmatpush1.msra.mxu0 0.0
    %747 = vmatprep.subr.mxu0 0.0
    %748 = vmatpush1.msra.mxu0 0.0
    %749 = vmatprep.subr.mxu0 0.0
    %750 = vmatpush1.msra.mxu0 0.0
    %751 = vmatprep.subr.mxu0 0.0
    %752 = vmatpush1.msra.mxu0 0.0
    %753 = vmatprep.subr.mxu0 0.0
    %754 = vmatpush1.msra.mxu0 0.0
    %755 = vmatprep.subr.mxu0 0.0
    %756 = vmatpush1.msra.mxu0 %v41
    %757 = vmatprep.subr.mxu0 0.0
    %758 = vmatpush2.msra.mxu0 0.0
    %759 = vmatprep.subr.mxu0 0.0
    %760 = vmatpush2.msra.mxu0 0.0
    %761 = vmatprep.subr.mxu0 0.0
    %762 = vmatpush2.msra.mxu0 0.0
    %763 = vmatprep.subr.mxu0 0.0
    %764 = vmatpush2.msra.mxu0 0.0
    %765 = vmatprep.subr.mxu0 0.0
    %766 = vmatpush2.msra.mxu0 0.0
    %767 = vmatprep.subr.mxu0 0.0
    %768 = vmatpush2.msra.mxu0 0.0
    %769 = vmatprep.subr.mxu0 0.0
    %770 = vmatpush2.msra.mxu0 0.0
    %771 = vmatprep.subr.mxu0 0.0
    %772 = vmatpush2.msra.mxu0 0.0
    %773 = vmatprep.subr.mxu0 0.0
    %774 = vmatpush2.msra.mxu0 0.0
    %775 = vmatprep.subr.mxu0 0.0
    %776 = vmatpush2.msra.mxu0 0.0
    %777 = vmatprep.subr.mxu0 0.0
    %778 = vmatpush2.msra.mxu0 0.0
    %779 = vmatprep.subr.mxu0 0.0
    %780 = vmatpush2.msra.mxu0 0.0
    %781 = vmatprep.subr.mxu0 0.0
    %782 = vmatpush2.msra.mxu0 0.0
    %783 = vmatprep.subr.mxu0 0.0
    %784 = vmatpush2.msra.mxu0 0.0
    %785 = vmatprep.subr.mxu0 0.0
    %786 = vmatpush2.msra.mxu0 0.0
    %787 = vmatprep.subr.mxu0 0.0
    %788 = vmatpush2.msra.mxu0 0.0
    %789 = vmatprep.mubr.f32.mxu0 0.0
    %790 = vmatmul.mubr.f32.gmra.mxu0 %v723
    %v791 = vpop.f32.mrf.mxu0
    %v792 = vadd.f32 0.0, %v791
    %v793 = vpop.f32.mrf.mxu0
    %794 = vdwg.mxu0
    %v796 = vsel %vm49, %v709, 0
    %798 = vmatprep.subr.mxu0 0.0
    %799 = vmatpush1.msra.mxu0 0.0
    %800 = vmatprep.subr.mxu0 0.0
    %801 = vmatpush1.msra.mxu0 0.0
    %802 = vmatprep.subr.mxu0 0.0
    %803 = vmatpush1.msra.mxu0 0.0
    %804 = vmatprep.subr.mxu0 0.0
    %805 = vmatpush1.msra.mxu0 0.0
    %806 = vmatprep.subr.mxu0 0.0
    %807 = vmatpush1.msra.mxu0 0.0
    %808 = vmatprep.subr.mxu0 0.0
    %809 = vmatpush1.msra.mxu0 0.0
    %810 = vmatprep.subr.mxu0 0.0
    %811 = vmatpush1.msra.mxu0 0.0
    %812 = vmatprep.subr.mxu0 0.0
    %813 = vmatpush1.msra.mxu0 0.0
    %814 = vmatprep.subr.mxu0 0.0
    %815 = vmatpush1.msra.mxu0 0.0
    %816 = vmatprep.subr.mxu0 0.0
    %817 = vmatpush1.msra.mxu0 0.0
    %818 = vmatprep.subr.mxu0 0.0
    %819 = vmatpush1.msra.mxu0 0.0
    %820 = vmatprep.subr.mxu0 0.0
    %821 = vmatpush1.msra.mxu0 0.0
    %822 = vmatprep.subr.mxu0 0.0
    %823 = vmatpush1.msra.mxu0 0.0
    %824 = vmatprep.subr.mxu0 0.0
    %825 = vmatpush1.msra.mxu0 0.0
    %826 = vmatprep.subr.mxu0 0.0
    %827 = vmatpush1.msra.mxu0 0.0
    %828 = vmatprep.subr.mxu0 0.0
    %829 = vmatpush1.msra.mxu0 %v42
    %830 = vmatprep.subr.mxu0 0.0
    %831 = vmatpush2.msra.mxu0 0.0
    %832 = vmatprep.subr.mxu0 0.0
    %833 = vmatpush2.msra.mxu0 0.0
    %834 = vmatprep.subr.mxu0 0.0
    %835 = vmatpush2.msra.mxu0 0.0
    %836 = vmatprep.subr.mxu0 0.0
    %837 = vmatpush2.msra.mxu0 0.0
    %838 = vmatprep.subr.mxu0 0.0
    %839 = vmatpush2.msra.mxu0 0.0
    %840 = vmatprep.subr.mxu0 0.0
    %841 = vmatpush2.msra.mxu0 0.0
    %842 = vmatprep.subr.mxu0 0.0
    %843 = vmatpush2.msra.mxu0 0.0
    %844 = vmatprep.subr.mxu0 0.0
    %845 = vmatpush2.msra.mxu0 0.0
    %846 = vmatprep.subr.mxu0 0.0
    %847 = vmatpush2.msra.mxu0 0.0
    %848 = vmatprep.subr.mxu0 0.0
    %849 = vmatpush2.msra.mxu0 0.0
    %850 = vmatprep.subr.mxu0 0.0
    %851 = vmatpush2.msra.mxu0 0.0
    %852 = vmatprep.subr.mxu0 0.0
    %853 = vmatpush2.msra.mxu0 0.0
    %854 = vmatprep.subr.mxu0 0.0
    %855 = vmatpush2.msra.mxu0 0.0
    %856 = vmatprep.subr.mxu0 0.0
    %857 = vmatpush2.msra.mxu0 0.0
    %858 = vmatprep.subr.mxu0 0.0
    %859 = vmatpush2.msra.mxu0 0.0
    %860 = vmatprep.subr.mxu0 0.0
    %861 = vmatpush2.msra.mxu0 0.0
    %862 = vmatprep.mubr.f32.mxu0 0.0
    %863 = vmatmul.mubr.f32.gmra.mxu0 %v796
    %v864 = vpop.f32.mrf.mxu0
    %v865 = vadd.f32 0.0, %v864
    %v866 = vpop.f32.mrf.mxu0
    %867 = vdwg.mxu0
    %v869 = vsel %vm49, %v711, 0
    %871 = vmatprep.subr.mxu0 0.0
    %872 = vmatpush1.msra.mxu0 0.0
    %873 = vmatprep.subr.mxu0 0.0
    %874 = vmatpush1.msra.mxu0 0.0
    %875 = vmatprep.subr.mxu0 0.0
    %876 = vmatpush1.msra.mxu0 0.0
    %877 = vmatprep.subr.mxu0 0.0
    %878 = vmatpush1.msra.mxu0 0.0
    %879 = vmatprep.subr.mxu0 0.0
    %880 = vmatpush1.msra.mxu0 0.0
    %881 = vmatprep.subr.mxu0 0.0
    %882 = vmatpush1.msra.mxu0 0.0
    %883 = vmatprep.subr.mxu0 0.0
    %884 = vmatpush1.msra.mxu0 0.0
    %885 = vmatprep.subr.mxu0 0.0
    %886 = vmatpush1.msra.mxu0 0.0
    %887 = vmatprep.subr.mxu0 0.0
    %888 = vmatpush1.msra.mxu0 0.0
    %889 = vmatprep.subr.mxu0 0.0
    %890 = vmatpush1.msra.mxu0 0.0
    %891 = vmatprep.subr.mxu0 0.0
    %892 = vmatpush1.msra.mxu0 0.0
    %893 = vmatprep.subr.mxu0 0.0
    %894 = vmatpush1.msra.mxu0 0.0
    %895 = vmatprep.subr.mxu0 0.0
    %896 = vmatpush1.msra.mxu0 0.0
    %897 = vmatprep.subr.mxu0 0.0
    %898 = vmatpush1.msra.mxu0 0.0
    %899 = vmatprep.subr.mxu0 0.0
    %900 = vmatpush1.msra.mxu0 0.0
    %901 = vmatprep.subr.mxu0 0.0
    %902 = vmatpush1.msra.mxu0 %v43
    %903 = vmatprep.subr.mxu0 0.0
    %904 = vmatpush2.msra.mxu0 0.0
    %905 = vmatprep.subr.mxu0 0.0
    %906 = vmatpush2.msra.mxu0 0.0
    %907 = vmatprep.subr.mxu0 0.0
    %908 = vmatpush2.msra.mxu0 0.0
    %909 = vmatprep.subr.mxu0 0.0
    %910 = vmatpush2.msra.mxu0 0.0
    %911 = vmatprep.subr.mxu0 0.0
    %912 = vmatpush2.msra.mxu0 0.0
    %913 = vmatprep.subr.mxu0 0.0
    %914 = vmatpush2.msra.mxu0 0.0
    %915 = vmatprep.subr.mxu0 0.0
    %916 = vmatpush2.msra.mxu0 0.0
    %917 = vmatprep.subr.mxu0 0.0
    %918 = vmatpush2.msra.mxu0 0.0
    %919 = vmatprep.subr.mxu0 0.0
    %920 = vmatpush2.msra.mxu0 0.0
    %921 = vmatprep.subr.mxu0 0.0
    %922 = vmatpush2.msra.mxu0 0.0
    %923 = vmatprep.subr.mxu0 0.0
    %924 = vmatpush2.msra.mxu0 0.0
    %925 = vmatprep.subr.mxu0 0.0
    %926 = vmatpush2.msra.mxu0 0.0
    %927 = vmatprep.subr.mxu0 0.0
    %928 = vmatpush2.msra.mxu0 0.0
    %929 = vmatprep.subr.mxu0 0.0
    %930 = vmatpush2.msra.mxu0 0.0
    %931 = vmatprep.subr.mxu0 0.0
    %932 = vmatpush2.msra.mxu0 0.0
    %933 = vmatprep.subr.mxu0 0.0
    %934 = vmatpush2.msra.mxu0 0.0
    %935 = vmatprep.mubr.f32.mxu0 0.0
    %936 = vmatmul.mubr.f32.gmra.mxu0 %v869
    %v937 = vpop.f32.mrf.mxu0
    %v938 = vadd.f32 0.0, %v937
    %v939 = vpop.f32.mrf.mxu0
    %940 = vdwg.mxu0
    %v942 = vsel %vm49, %v713, 0
    %944 = vmatprep.subr.mxu0 0.0
    %945 = vmatpush1.msra.mxu0 0.0
    %946 = vmatprep.subr.mxu0 0.0
    %947 = vmatpush1.msra.mxu0 0.0
    %948 = vmatprep.subr.mxu0 0.0
    %949 = vmatpush1.msra.mxu0 0.0
    %950 = vmatprep.subr.mxu0 0.0
    %951 = vmatpush1.msra.mxu0 0.0
    %952 = vmatprep.subr.mxu0 0.0
    %953 = vmatpush1.msra.mxu0 0.0
    %954 = vmatprep.subr.mxu0 0.0
    %955 = vmatpush1.msra.mxu0 0.0
    %956 = vmatprep.subr.mxu0 0.0
    %957 = vmatpush1.msra.mxu0 0.0
    %958 = vmatprep.subr.mxu0 0.0
    %959 = vmatpush1.msra.mxu0 0.0
    %960 = vmatprep.subr.mxu0 0.0
    %961 = vmatpush1.msra.mxu0 0.0
    %962 = vmatprep.subr.mxu0 0.0
    %963 = vmatpush1.msra.mxu0 0.0
    %964 = vmatprep.subr.mxu0 0.0
    %965 = vmatpush1.msra.mxu0 0.0
    %966 = vmatprep.subr.mxu0 0.0
    %967 = vmatpush1.msra.mxu0 0.0
    %968 = vmatprep.subr.mxu0 0.0
    %969 = vmatpush1.msra.mxu0 0.0
    %970 = vmatprep.subr.mxu0 0.0
    %971 = vmatpush1.msra.mxu0 0.0
    %972 = vmatprep.subr.mxu0 0.0
    %973 = vmatpush1.msra.mxu0 0.0
    %974 = vmatprep.subr.mxu0 0.0
    %975 = vmatpush1.msra.mxu0 %v44
    %976 = vmatprep.subr.mxu0 0.0
    %977 = vmatpush2.msra.mxu0 0.0
    %978 = vmatprep.subr.mxu0 0.0
    %979 = vmatpush2.msra.mxu0 0.0
    %980 = vmatprep.subr.mxu0 0.0
    %981 = vmatpush2.msra.mxu0 0.0
    %982 = vmatprep.subr.mxu0 0.0
    %983 = vmatpush2.msra.mxu0 0.0
    %984 = vmatprep.subr.mxu0 0.0
    %985 = vmatpush2.msra.mxu0 0.0
    %986 = vmatprep.subr.mxu0 0.0
    %987 = vmatpush2.msra.mxu0 0.0
    %988 = vmatprep.subr.mxu0 0.0
    %989 = vmatpush2.msra.mxu0 0.0
    %990 = vmatprep.subr.mxu0 0.0
    %991 = vmatpush2.msra.mxu0 0.0
    %992 = vmatprep.subr.mxu0 0.0
    %993 = vmatpush2.msra.mxu0 0.0
    %994 = vmatprep.subr.mxu0 0.0
    %995 = vmatpush2.msra.mxu0 0.0
    %996 = vmatprep.subr.mxu0 0.0
    %997 = vmatpush2.msra.mxu0 0.0
    %998 = vmatprep.subr.mxu0 0.0
    %999 = vmatpush2.msra.mxu0 0.0
    %1000 = vmatprep.subr.mxu0 0.0
    %1001 = vmatpush2.msra.mxu0 0.0
    %1002 = vmatprep.subr.mxu0 0.0
    %1003 = vmatpush2.msra.mxu0 0.0
    %1004 = vmatprep.subr.mxu0 0.0
    %1005 = vmatpush2.msra.mxu0 0.0
    %1006 = vmatprep.subr.mxu0 0.0
    %1007 = vmatpush2.msra.mxu0 0.0
    %1008 = vmatprep.mubr.f32.mxu0 0.0
    %1009 = vmatmul.mubr.f32.gmra.mxu0 %v942
    %v1010 = vpop.f32.mrf.mxu0
    %v1011 = vadd.f32 0.0, %v1010
    %v1012 = vpop.f32.mrf.mxu0
    %1013 = vdwg.mxu0
    %v1015 = vsel %vm49, %v715, 0
    %1017 = vmatprep.subr.mxu0 0.0
    %1018 = vmatpush1.msra.mxu0 0.0
    %1019 = vmatprep.subr.mxu0 0.0
    %1020 = vmatpush1.msra.mxu0 0.0
    %1021 = vmatprep.subr.mxu0 0.0
    %1022 = vmatpush1.msra.mxu0 0.0
    %1023 = vmatprep.subr.mxu0 0.0
    %1024 = vmatpush1.msra.mxu0 0.0
    %1025 = vmatprep.subr.mxu0 0.0
    %1026 = vmatpush1.msra.mxu0 0.0
    %1027 = vmatprep.subr.mxu0 0.0
    %1028 = vmatpush1.msra.mxu0 0.0
    %1029 = vmatprep.subr.mxu0 0.0
    %1030 = vmatpush1.msra.mxu0 0.0
    %1031 = vmatprep.subr.mxu0 0.0
    %1032 = vmatpush1.msra.mxu0 0.0
    %1033 = vmatprep.subr.mxu0 0.0
    %1034 = vmatpush1.msra.mxu0 0.0
    %1035 = vmatprep.subr.mxu0 0.0
    %1036 = vmatpush1.msra.mxu0 0.0
    %1037 = vmatprep.subr.mxu0 0.0
    %1038 = vmatpush1.msra.mxu0 0.0
    %1039 = vmatprep.subr.mxu0 0.0
    %1040 = vmatpush1.msra.mxu0 0.0
    %1041 = vmatprep.subr.mxu0 0.0
    %1042 = vmatpush1.msra.mxu0 0.0
    %1043 = vmatprep.subr.mxu0 0.0
    %1044 = vmatpush1.msra.mxu0 0.0
    %1045 = vmatprep.subr.mxu0 0.0
    %1046 = vmatpush1.msra.mxu0 0.0
    %1047 = vmatprep.subr.mxu0 0.0
    %1048 = vmatpush1.msra.mxu0 %v45
    %1049 = vmatprep.subr.mxu0 0.0
    %1050 = vmatpush2.msra.mxu0 0.0
    %1051 = vmatprep.subr.mxu0 0.0
    %1052 = vmatpush2.msra.mxu0 0.0
    %1053 = vmatprep.subr.mxu0 0.0
    %1054 = vmatpush2.msra.mxu0 0.0
    %1055 = vmatprep.subr.mxu0 0.0
    %1056 = vmatpush2.msra.mxu0 0.0
    %1057 = vmatprep.subr.mxu0 0.0
    %1058 = vmatpush2.msra.mxu0 0.0
    %1059 = vmatprep.subr.mxu0 0.0
    %1060 = vmatpush2.msra.mxu0 0.0
    %1061 = vmatprep.subr.mxu0 0.0
    %1062 = vmatpush2.msra.mxu0 0.0
    %1063 = vmatprep.subr.mxu0 0.0
    %1064 = vmatpush2.msra.mxu0 0.0
    %1065 = vmatprep.subr.mxu0 0.0
    %1066 = vmatpush2.msra.mxu0 0.0
    %1067 = vmatprep.subr.mxu0 0.0
    %1068 = vmatpush2.msra.mxu0 0.0
    %1069 = vmatprep.subr.mxu0 0.0
    %1070 = vmatpush2.msra.mxu0 0.0
    %1071 = vmatprep.subr.mxu0 0.0
    %1072 = vmatpush2.msra.mxu0 0.0
    %1073 = vmatprep.subr.mxu0 0.0
    %1074 = vmatpush2.msra.mxu0 0.0
    %1075 = vmatprep.subr.mxu0 0.0
    %1076 = vmatpush2.msra.mxu0 0.0
    %1077 = vmatprep.subr.mxu0 0.0
    %1078 = vmatpush2.msra.mxu0 0.0
    %1079 = vmatprep.subr.mxu0 0.0
    %1080 = vmatpush2.msra.mxu0 0.0
    %1081 = vmatprep.mubr.f32.mxu0 0.0
    %1082 = vmatmul.mubr.f32.gmra.mxu0 %v1015
    %v1083 = vpop.f32.mrf.mxu0
    %v1084 = vadd.f32 0.0, %v1083
    %v1085 = vpop.f32.mrf.mxu0
    %1086 = vdwg.mxu0
    %v1088 = vsel %vm49, %v717, 0
    %1090 = vmatprep.subr.mxu0 0.0
    %1091 = vmatpush1.msra.mxu0 0.0
    %1092 = vmatprep.subr.mxu0 0.0
    %1093 = vmatpush1.msra.mxu0 0.0
    %1094 = vmatprep.subr.mxu0 0.0
    %1095 = vmatpush1.msra.mxu0 0.0
    %1096 = vmatprep.subr.mxu0 0.0
    %1097 = vmatpush1.msra.mxu0 0.0
    %1098 = vmatprep.subr.mxu0 0.0
    %1099 = vmatpush1.msra.mxu0 0.0
    %1100 = vmatprep.subr.mxu0 0.0
    %1101 = vmatpush1.msra.mxu0 0.0
    %1102 = vmatprep.subr.mxu0 0.0
    %1103 = vmatpush1.msra.mxu0 0.0
    %1104 = vmatprep.subr.mxu0 0.0
    %1105 = vmatpush1.msra.mxu0 0.0
    %1106 = vmatprep.subr.mxu0 0.0
    %1107 = vmatpush1.msra.mxu0 0.0
    %1108 = vmatprep.subr.mxu0 0.0
    %1109 = vmatpush1.msra.mxu0 0.0
    %1110 = vmatprep.subr.mxu0 0.0
    %1111 = vmatpush1.msra.mxu0 0.0
    %1112 = vmatprep.subr.mxu0 0.0
    %1113 = vmatpush1.msra.mxu0 0.0
    %1114 = vmatprep.subr.mxu0 0.0
    %1115 = vmatpush1.msra.mxu0 0.0
    %1116 = vmatprep.subr.mxu0 0.0
    %1117 = vmatpush1.msra.mxu0 0.0
    %1118 = vmatprep.subr.mxu0 0.0
    %1119 = vmatpush1.msra.mxu0 0.0
    %1120 = vmatprep.subr.mxu0 0.0
    %1121 = vmatpush1.msra.mxu0 %v46
    %1122 = vmatprep.subr.mxu0 0.0
    %1123 = vmatpush2.msra.mxu0 0.0
    %1124 = vmatprep.subr.mxu0 0.0
    %1125 = vmatpush2.msra.mxu0 0.0
    %1126 = vmatprep.subr.mxu0 0.0
    %1127 = vmatpush2.msra.mxu0 0.0
    %1128 = vmatprep.subr.mxu0 0.0
    %1129 = vmatpush2.msra.mxu0 0.0
    %1130 = vmatprep.subr.mxu0 0.0
    %1131 = vmatpush2.msra.mxu0 0.0
    %1132 = vmatprep.subr.mxu0 0.0
    %1133 = vmatpush2.msra.mxu0 0.0
    %1134 = vmatprep.subr.mxu0 0.0
    %1135 = vmatpush2.msra.mxu0 0.0
    %1136 = vmatprep.subr.mxu0 0.0
    %1137 = vmatpush2.msra.mxu0 0.0
    %1138 = vmatprep.subr.mxu0 0.0
    %1139 = vmatpush2.msra.mxu0 0.0
    %1140 = vmatprep.subr.mxu0 0.0
    %1141 = vmatpush2.msra.mxu0 0.0
    %1142 = vmatprep.subr.mxu0 0.0
    %1143 = vmatpush2.msra.mxu0 0.0
    %1144 = vmatprep.subr.mxu0 0.0
    %1145 = vmatpush2.msra.mxu0 0.0
    %1146 = vmatprep.subr.mxu0 0.0
    %1147 = vmatpush2.msra.mxu0 0.0
    %1148 = vmatprep.subr.mxu0 0.0
    %1149 = vmatpush2.msra.mxu0 0.0
    %1150 = vmatprep.subr.mxu0 0.0
    %1151 = vmatpush2.msra.mxu0 0.0
    %1152 = vmatprep.subr.mxu0 0.0
    %1153 = vmatpush2.msra.mxu0 0.0
    %1154 = vmatprep.mubr.f32.mxu0 0.0
    %1155 = vmatmul.mubr.f32.gmra.mxu0 %v1088
    %v1156 = vpop.f32.mrf.mxu0
    %v1157 = vadd.f32 0.0, %v1156
    %v1158 = vpop.f32.mrf.mxu0
    %1159 = vdwg.mxu0
    %v1161 = vsel %vm49, %v719, 0
    %1163 = vmatprep.subr.mxu0 0.0
    %1164 = vmatpush1.msra.mxu0 0.0
    %1165 = vmatprep.subr.mxu0 0.0
    %1166 = vmatpush1.msra.mxu0 0.0
    %1167 = vmatprep.subr.mxu0 0.0
    %1168 = vmatpush1.msra.mxu0 0.0
    %1169 = vmatprep.subr.mxu0 0.0
    %1170 = vmatpush1.msra.mxu0 0.0
    %1171 = vmatprep.subr.mxu0 0.0
    %1172 = vmatpush1.msra.mxu0 0.0
    %1173 = vmatprep.subr.mxu0 0.0
    %1174 = vmatpush1.msra.mxu0 0.0
    %1175 = vmatprep.subr.mxu0 0.0
    %1176 = vmatpush1.msra.mxu0 0.0
    %1177 = vmatprep.subr.mxu0 0.0
    %1178 = vmatpush1.msra.mxu0 0.0
    %1179 = vmatprep.subr.mxu0 0.0
    %1180 = vmatpush1.msra.mxu0 0.0
    %1181 = vmatprep.subr.mxu0 0.0
    %1182 = vmatpush1.msra.mxu0 0.0
    %1183 = vmatprep.subr.mxu0 0.0
    %1184 = vmatpush1.msra.mxu0 0.0
    %1185 = vmatprep.subr.mxu0 0.0
    %1186 = vmatpush1.msra.mxu0 0.0
    %1187 = vmatprep.subr.mxu0 0.0
    %1188 = vmatpush1.msra.mxu0 0.0
    %1189 = vmatprep.subr.mxu0 0.0
    %1190 = vmatpush1.msra.mxu0 0.0
    %1191 = vmatprep.subr.mxu0 0.0
    %1192 = vmatpush1.msra.mxu0 0.0
    %1193 = vmatprep.subr.mxu0 0.0
    %1194 = vmatpush1.msra.mxu0 %v47
    %1195 = vmatprep.subr.mxu0 0.0
    %1196 = vmatpush2.msra.mxu0 0.0
    %1197 = vmatprep.subr.mxu0 0.0
    %1198 = vmatpush2.msra.mxu0 0.0
    %1199 = vmatprep.subr.mxu0 0.0
    %1200 = vmatpush2.msra.mxu0 0.0
    %1201 = vmatprep.subr.mxu0 0.0
    %1202 = vmatpush2.msra.mxu0 0.0
    %1203 = vmatprep.subr.mxu0 0.0
    %1204 = vmatpush2.msra.mxu0 0.0
    %1205 = vmatprep.subr.mxu0 0.0
    %1206 = vmatpush2.msra.mxu0 0.0
    %1207 = vmatprep.subr.mxu0 0.0
    %1208 = vmatpush2.msra.mxu0 0.0
    %1209 = vmatprep.subr.mxu0 0.0
    %1210 = vmatpush2.msra.mxu0 0.0
    %1211 = vmatprep.subr.mxu0 0.0
    %1212 = vmatpush2.msra.mxu0 0.0
    %1213 = vmatprep.subr.mxu0 0.0
    %1214 = vmatpush2.msra.mxu0 0.0
    %1215 = vmatprep.subr.mxu0 0.0
    %1216 = vmatpush2.msra.mxu0 0.0
    %1217 = vmatprep.subr.mxu0 0.0
    %1218 = vmatpush2.msra.mxu0 0.0
    %1219 = vmatprep.subr.mxu0 0.0
    %1220 = vmatpush2.msra.mxu0 0.0
    %1221 = vmatprep.subr.mxu0 0.0
    %1222 = vmatpush2.msra.mxu0 0.0
    %1223 = vmatprep.subr.mxu0 0.0
    %1224 = vmatpush2.msra.mxu0 0.0
    %1225 = vmatprep.subr.mxu0 0.0
    %1226 = vmatpush2.msra.mxu0 0.0
    %1227 = vmatprep.mubr.f32.mxu0 0.0
    %1228 = vmatmul.mubr.f32.gmra.mxu0 %v1161
    %v1229 = vpop.f32.mrf.mxu0
    %v1230 = vadd.f32 0.0, %v1229
    %v1231 = vpop.f32.mrf.mxu0
    %1232 = vdwg.mxu0
    %v1234 = vsel %vm49, %v721, 0
    %1236 = vmatprep.subr.mxu0 0.0
    %1237 = vmatpush1.msra.mxu0 0.0
    %1238 = vmatprep.subr.mxu0 0.0
    %1239 = vmatpush1.msra.mxu0 0.0
    %1240 = vmatprep.subr.mxu0 0.0
    %1241 = vmatpush1.msra.mxu0 0.0
    %1242 = vmatprep.subr.mxu0 0.0
    %1243 = vmatpush1.msra.mxu0 0.0
    %1244 = vmatprep.subr.mxu0 0.0
    %1245 = vmatpush1.msra.mxu0 0.0
    %1246 = vmatprep.subr.mxu0 0.0
    %1247 = vmatpush1.msra.mxu0 0.0
    %1248 = vmatprep.subr.mxu0 0.0
    %1249 = vmatpush1.msra.mxu0 0.0
    %1250 = vmatprep.subr.mxu0 0.0
    %1251 = vmatpush1.msra.mxu0 0.0
    %1252 = vmatprep.subr.mxu0 0.0
    %1253 = vmatpush1.msra.mxu0 0.0
    %1254 = vmatprep.subr.mxu0 0.0
    %1255 = vmatpush1.msra.mxu0 0.0
    %1256 = vmatprep.subr.mxu0 0.0
    %1257 = vmatpush1.msra.mxu0 0.0
    %1258 = vmatprep.subr.mxu0 0.0
    %1259 = vmatpush1.msra.mxu0 0.0
    %1260 = vmatprep.subr.mxu0 0.0
    %1261 = vmatpush1.msra.mxu0 0.0
    %1262 = vmatprep.subr.mxu0 0.0
    %1263 = vmatpush1.msra.mxu0 0.0
    %1264 = vmatprep.subr.mxu0 0.0
    %1265 = vmatpush1.msra.mxu0 0.0
    %1266 = vmatprep.subr.mxu0 0.0
    %1267 = vmatpush1.msra.mxu0 %v48
    %1268 = vmatprep.subr.mxu0 0.0
    %1269 = vmatpush2.msra.mxu0 0.0
    %1270 = vmatprep.subr.mxu0 0.0
    %1271 = vmatpush2.msra.mxu0 0.0
    %1272 = vmatprep.subr.mxu0 0.0
    %1273 = vmatpush2.msra.mxu0 0.0
    %1274 = vmatprep.subr.mxu0 0.0
    %1275 = vmatpush2.msra.mxu0 0.0
    %1276 = vmatprep.subr.mxu0 0.0
    %1277 = vmatpush2.msra.mxu0 0.0
    %1278 = vmatprep.subr.mxu0 0.0
    %1279 = vmatpush2.msra.mxu0 0.0
    %1280 = vmatprep.subr.mxu0 0.0
    %1281 = vmatpush2.msra.mxu0 0.0
    %1282 = vmatprep.subr.mxu0 0.0
    %1283 = vmatpush2.msra.mxu0 0.0
    %1284 = vmatprep.subr.mxu0 0.0
    %1285 = vmatpush2.msra.mxu0 0.0
    %1286 = vmatprep.subr.mxu0 0.0
    %1287 = vmatpush2.msra.mxu0 0.0
    %1288 = vmatprep.subr.mxu0 0.0
    %1289 = vmatpush2.msra.mxu0 0.0
    %1290 = vmatprep.subr.mxu0 0.0
    %1291 = vmatpush2.msra.mxu0 0.0
    %1292 = vmatprep.subr.mxu0 0.0
    %1293 = vmatpush2.msra.mxu0 0.0
    %1294 = vmatprep.subr.mxu0 0.0
    %1295 = vmatpush2.msra.mxu0 0.0
    %1296 = vmatprep.subr.mxu0 0.0
    %1297 = vmatpush2.msra.mxu0 0.0
    %1298 = vmatprep.subr.mxu0 0.0
    %1299 = vmatpush2.msra.mxu0 0.0
    %1300 = vmatprep.mubr.f32.mxu0 0.0
    %1301 = vmatmul.mubr.f32.gmra.mxu0 %v1234
    %v1302 = vpop.f32.mrf.mxu0
    %v1303 = vadd.f32 0.0, %v1302
    %v1304 = vpop.f32.mrf.mxu0
    %1305 = vdwg.mxu0
    %v1306 = vld [vmem:[%s1 + $0x10] sm:$0xff]
    %v1307 = vld [vmem:[%s1 + $0x18] sm:$0xff]
    %v1308 = vld [vmem:[%s1 + $0x20] sm:$0xff]
    %v1309 = vld [vmem:[%s1 + $0x28] sm:$0xff]
    %v1310 = vld [vmem:[%s1 + $0x30] sm:$0xff]
    %v1311 = vld [vmem:[%s1 + $0x38] sm:$0xff]
    %v1312 = vld [vmem:[%s1 + $0x40] sm:$0xff]
    %v1313 = vld [vmem:[%s1 + $0x48] sm:$0xff]
    %v1314 = vld [vmem:[%s1 + $0x50] sm:$0xff]
    %v1315 = vld [vmem:[%s1 + $0x58] sm:$0xff]
    %v1316 = vld [vmem:[%s1 + $0x60] sm:$0xff]
    %v1317 = vld [vmem:[%s1 + $0x68] sm:$0xff]
    %v1318 = vld [vmem:[%s1 + $0x70] sm:$0x1]
    %v1319 = vld [vmem:[%s1 + $0x71] sm:$0x1]
    %v1320 = vld [vmem:[%s1 + $0x72] sm:$0x1]
    %v1321 = vld [vmem:[%s1 + $0x73] sm:$0x1]
    %v1322 = vld [vmem:[%s1 + $0x74] sm:$0x1]
    %v1323 = vld [vmem:[%s1 + $0x75] sm:$0x1]
    %v1324 = vld [vmem:[%s1] sm:$0xff]
    %v1325 = vld [vmem:[%s1 + $0x8] sm:$0xff]
    %v1326 = vld [vmem:[%s2] sm:$0xff]
    %v1327 = vld [vmem:[%s2 + $0x8] sm:$0xff]
    %v1328 = vld [vmem:[%s2 + $0x10] sm:$0xff]
    %v1329 = vld [vmem:[%s2 + $0x18] sm:$0xff]
    %v1330 = vld [vmem:[%s2 + $0x20] sm:$0x1]
    %v1332 = vsel %vm49, %v792, 0
    %v1335 = vsel %vm49, %v865, 0
    %1337 = vmatprep.subr.mxu0 0.0
    %1338 = vmatpush1.msra.mxu0 0.0
    %1339 = vmatprep.subr.mxu0 0.0
    %1340 = vmatpush1.msra.mxu0 0.0
    %1341 = vmatprep.subr.mxu0 0.0
    %1342 = vmatpush1.msra.mxu0 0.0
    %1343 = vmatprep.subr.mxu0 0.0
    %1344 = vmatpush1.msra.mxu0 0.0
    %1345 = vmatprep.subr.mxu0 0.0
    %1346 = vmatpush1.msra.mxu0 0.0
    %1347 = vmatprep.subr.mxu0 0.0
    %1348 = vmatpush1.msra.mxu0 0.0
    %1349 = vmatprep.subr.mxu0 0.0
    %1350 = vmatpush1.msra.mxu0 0.0
    %1351 = vmatprep.subr.mxu0 0.0
    %1352 = vmatpush1.msra.mxu0 0.0
    %1353 = vmatprep.subr.mxu0 0.0
    %1354 = vmatpush1.msra.mxu0 0.0
    %1355 = vmatprep.subr.mxu0 0.0
    %1356 = vmatpush1.msra.mxu0 0.0
    %1357 = vmatprep.subr.mxu0 0.0
    %1358 = vmatpush1.msra.mxu0 0.0
    %1359 = vmatprep.subr.mxu0 0.0
    %1360 = vmatpush1.msra.mxu0 0.0
    %1361 = vmatprep.subr.mxu0 0.0
    %1362 = vmatpush1.msra.mxu0 0.0
    %1363 = vmatprep.subr.mxu0 0.0
    %1364 = vmatpush1.msra.mxu0 0.0
    %1365 = vmatprep.subr.mxu0 0.0
    %1366 = vmatpush1.msra.mxu0 0.0
    %1367 = vmatprep.subr.mxu0 0.0
    %1368 = vmatpush1.msra.mxu0 %v1306
    %1369 = vmatprep.subr.mxu0 0.0
    %1370 = vmatpush2.msra.mxu0 0.0
    %1371 = vmatprep.subr.mxu0 0.0
    %1372 = vmatpush2.msra.mxu0 0.0
    %1373 = vmatprep.subr.mxu0 0.0
    %1374 = vmatpush2.msra.mxu0 0.0
    %1375 = vmatprep.subr.mxu0 0.0
    %1376 = vmatpush2.msra.mxu0 0.0
    %1377 = vmatprep.subr.mxu0 0.0
    %1378 = vmatpush2.msra.mxu0 0.0
    %1379 = vmatprep.subr.mxu0 0.0
    %1380 = vmatpush2.msra.mxu0 0.0
    %1381 = vmatprep.subr.mxu0 0.0
    %1382 = vmatpush2.msra.mxu0 0.0
    %1383 = vmatprep.subr.mxu0 0.0
    %1384 = vmatpush2.msra.mxu0 0.0
    %1385 = vmatprep.subr.mxu0 0.0
    %1386 = vmatpush2.msra.mxu0 0.0
    %1387 = vmatprep.subr.mxu0 0.0
    %1388 = vmatpush2.msra.mxu0 0.0
    %1389 = vmatprep.subr.mxu0 0.0
    %1390 = vmatpush2.msra.mxu0 0.0
    %1391 = vmatprep.subr.mxu0 0.0
    %1392 = vmatpush2.msra.mxu0 0.0
    %1393 = vmatprep.subr.mxu0 0.0
    %1394 = vmatpush2.msra.mxu0 0.0
    %1395 = vmatprep.subr.mxu0 0.0
    %1396 = vmatpush2.msra.mxu0 0.0
    %1397 = vmatprep.subr.mxu0 0.0
    %1398 = vmatpush2.msra.mxu0 0.0
    %1399 = vmatprep.subr.mxu0 0.0
    %1400 = vmatpush2.msra.mxu0 0.0
    %1401 = vmatprep.mubr.f32.mxu0 0.0
    %1402 = vmatmul.mubr.f32.gmra.mxu0 %v1332
    %v1403 = vpop.f32.mrf.mxu0
    %v1404 = vadd.f32 0.0, %v1403
    %v1405 = vpop.f32.mrf.mxu0
    %1406 = vmatprep.mubr.f32.mxu0 0.0
    %1407 = vmatmul.mubr.f32.gmra.mxu0 %v1335
    %v1408 = vpop.f32.mrf.mxu0
    %v1409 = vadd.f32 0.0, %v1408
    %v1410 = vpop.f32.mrf.mxu0
    %1411 = vdwg.mxu0
    %v1413 = vsel %vm49, %v938, 0
    %v1416 = vsel %vm49, %v1011, 0
    %1418 = vmatprep.subr.mxu0 0.0
    %1419 = vmatpush1.msra.mxu0 0.0
    %1420 = vmatprep.subr.mxu0 0.0
    %1421 = vmatpush1.msra.mxu0 0.0
    %1422 = vmatprep.subr.mxu0 0.0
    %1423 = vmatpush1.msra.mxu0 0.0
    %1424 = vmatprep.subr.mxu0 0.0
    %1425 = vmatpush1.msra.mxu0 0.0
    %1426 = vmatprep.subr.mxu0 0.0
    %1427 = vmatpush1.msra.mxu0 0.0
    %1428 = vmatprep.subr.mxu0 0.0
    %1429 = vmatpush1.msra.mxu0 0.0
    %1430 = vmatprep.subr.mxu0 0.0
    %1431 = vmatpush1.msra.mxu0 0.0
    %1432 = vmatprep.subr.mxu0 0.0
    %1433 = vmatpush1.msra.mxu0 0.0
    %1434 = vmatprep.subr.mxu0 0.0
    %1435 = vmatpush1.msra.mxu0 0.0
    %1436 = vmatprep.subr.mxu0 0.0
    %1437 = vmatpush1.msra.mxu0 0.0
    %1438 = vmatprep.subr.mxu0 0.0
    %1439 = vmatpush1.msra.mxu0 0.0
    %1440 = vmatprep.subr.mxu0 0.0
    %1441 = vmatpush1.msra.mxu0 0.0
    %1442 = vmatprep.subr.mxu0 0.0
    %1443 = vmatpush1.msra.mxu0 0.0
    %1444 = vmatprep.subr.mxu0 0.0
    %1445 = vmatpush1.msra.mxu0 0.0
    %1446 = vmatprep.subr.mxu0 0.0
    %1447 = vmatpush1.msra.mxu0 0.0
    %1448 = vmatprep.subr.mxu0 0.0
    %1449 = vmatpush1.msra.mxu0 %v1307
    %1450 = vmatprep.subr.mxu0 0.0
    %1451 = vmatpush2.msra.mxu0 0.0
    %1452 = vmatprep.subr.mxu0 0.0
    %1453 = vmatpush2.msra.mxu0 0.0
    %1454 = vmatprep.subr.mxu0 0.0
    %1455 = vmatpush2.msra.mxu0 0.0
    %1456 = vmatprep.subr.mxu0 0.0
    %1457 = vmatpush2.msra.mxu0 0.0
    %1458 = vmatprep.subr.mxu0 0.0
    %1459 = vmatpush2.msra.mxu0 0.0
    %1460 = vmatprep.subr.mxu0 0.0
    %1461 = vmatpush2.msra.mxu0 0.0
    %1462 = vmatprep.subr.mxu0 0.0
    %1463 = vmatpush2.msra.mxu0 0.0
    %1464 = vmatprep.subr.mxu0 0.0
    %1465 = vmatpush2.msra.mxu0 0.0
    %1466 = vmatprep.subr.mxu0 0.0
    %1467 = vmatpush2.msra.mxu0 0.0
    %1468 = vmatprep.subr.mxu0 0.0
    %1469 = vmatpush2.msra.mxu0 0.0
    %1470 = vmatprep.subr.mxu0 0.0
    %1471 = vmatpush2.msra.mxu0 0.0
    %1472 = vmatprep.subr.mxu0 0.0
    %1473 = vmatpush2.msra.mxu0 0.0
    %1474 = vmatprep.subr.mxu0 0.0
    %1475 = vmatpush2.msra.mxu0 0.0
    %1476 = vmatprep.subr.mxu0 0.0
    %1477 = vmatpush2.msra.mxu0 0.0
    %1478 = vmatprep.subr.mxu0 0.0
    %1479 = vmatpush2.msra.mxu0 0.0
    %1480 = vmatprep.subr.mxu0 0.0
    %1481 = vmatpush2.msra.mxu0 0.0
    %1482 = vmatprep.mubr.f32.mxu0 0.0
    %1483 = vmatmul.mubr.f32.gmra.mxu0 %v1413
    %v1484 = vpop.f32.mrf.mxu0
    %v1485 = vadd.f32 0.0, %v1484
    %v1486 = vpop.f32.mrf.mxu0
    %1487 = vmatprep.mubr.f32.mxu0 0.0
    %1488 = vmatmul.mubr.f32.gmra.mxu0 %v1416
    %v1489 = vpop.f32.mrf.mxu0
    %v1490 = vadd.f32 0.0, %v1489
    %v1491 = vpop.f32.mrf.mxu0
    %1492 = vdwg.mxu0
    %v1494 = vsel %vm49, %v1084, 0
    %v1497 = vsel %vm49, %v1157, 0
    %1499 = vmatprep.subr.mxu0 0.0
    %1500 = vmatpush1.msra.mxu0 0.0
    %1501 = vmatprep.subr.mxu0 0.0
    %1502 = vmatpush1.msra.mxu0 0.0
    %1503 = vmatprep.subr.mxu0 0.0
    %1504 = vmatpush1.msra.mxu0 0.0
    %1505 = vmatprep.subr.mxu0 0.0
    %1506 = vmatpush1.msra.mxu0 0.0
    %1507 = vmatprep.subr.mxu0 0.0
    %1508 = vmatpush1.msra.mxu0 0.0
    %1509 = vmatprep.subr.mxu0 0.0
    %1510 = vmatpush1.msra.mxu0 0.0
    %1511 = vmatprep.subr.mxu0 0.0
    %1512 = vmatpush1.msra.mxu0 0.0
    %1513 = vmatprep.subr.mxu0 0.0
    %1514 = vmatpush1.msra.mxu0 0.0
    %1515 = vmatprep.subr.mxu0 0.0
    %1516 = vmatpush1.msra.mxu0 0.0
    %1517 = vmatprep.subr.mxu0 0.0
    %1518 = vmatpush1.msra.mxu0 0.0
    %1519 = vmatprep.subr.mxu0 0.0
    %1520 = vmatpush1.msra.mxu0 0.0
    %1521 = vmatprep.subr.mxu0 0.0
    %1522 = vmatpush1.msra.mxu0 0.0
    %1523 = vmatprep.subr.mxu0 0.0
    %1524 = vmatpush1.msra.mxu0 0.0
    %1525 = vmatprep.subr.mxu0 0.0
    %1526 = vmatpush1.msra.mxu0 0.0
    %1527 = vmatprep.subr.mxu0 0.0
    %1528 = vmatpush1.msra.mxu0 0.0
    %1529 = vmatprep.subr.mxu0 0.0
    %1530 = vmatpush1.msra.mxu0 %v1308
    %1531 = vmatprep.subr.mxu0 0.0
    %1532 = vmatpush2.msra.mxu0 0.0
    %1533 = vmatprep.subr.mxu0 0.0
    %1534 = vmatpush2.msra.mxu0 0.0
    %1535 = vmatprep.subr.mxu0 0.0
    %1536 = vmatpush2.msra.mxu0 0.0
    %1537 = vmatprep.subr.mxu0 0.0
    %1538 = vmatpush2.msra.mxu0 0.0
    %1539 = vmatprep.subr.mxu0 0.0
    %1540 = vmatpush2.msra.mxu0 0.0
    %1541 = vmatprep.subr.mxu0 0.0
    %1542 = vmatpush2.msra.mxu0 0.0
    %1543 = vmatprep.subr.mxu0 0.0
    %1544 = vmatpush2.msra.mxu0 0.0
    %1545 = vmatprep.subr.mxu0 0.0
    %1546 = vmatpush2.msra.mxu0 0.0
    %1547 = vmatprep.subr.mxu0 0.0
    %1548 = vmatpush2.msra.mxu0 0.0
    %1549 = vmatprep.subr.mxu0 0.0
    %1550 = vmatpush2.msra.mxu0 0.0
    %1551 = vmatprep.subr.mxu0 0.0
    %1552 = vmatpush2.msra.mxu0 0.0
    %1553 = vmatprep.subr.mxu0 0.0
    %1554 = vmatpush2.msra.mxu0 0.0
    %1555 = vmatprep.subr.mxu0 0.0
    %1556 = vmatpush2.msra.mxu0 0.0
    %1557 = vmatprep.subr.mxu0 0.0
    %1558 = vmatpush2.msra.mxu0 0.0
    %1559 = vmatprep.subr.mxu0 0.0
    %1560 = vmatpush2.msra.mxu0 0.0
    %1561 = vmatprep.subr.mxu0 0.0
    %1562 = vmatpush2.msra.mxu0 0.0
    %1563 = vmatprep.mubr.f32.mxu0 0.0
    %1564 = vmatmul.mubr.f32.gmra.mxu0 %v1494
    %v1565 = vpop.f32.mrf.mxu0
    %v1566 = vadd.f32 0.0, %v1565
    %v1567 = vpop.f32.mrf.mxu0
    %1568 = vmatprep.mubr.f32.mxu0 0.0
    %1569 = vmatmul.mubr.f32.gmra.mxu0 %v1497
    %v1570 = vpop.f32.mrf.mxu0
    %v1571 = vadd.f32 0.0, %v1570
    %v1572 = vpop.f32.mrf.mxu0
    %1573 = vdwg.mxu0
    %v1575 = vsel %vm49, %v1230, 0
    %v1578 = vsel %vm49, %v1303, 0
    %1580 = vmatprep.subr.mxu0 0.0
    %1581 = vmatpush1.msra.mxu0 0.0
    %1582 = vmatprep.subr.mxu0 0.0
    %1583 = vmatpush1.msra.mxu0 0.0
    %1584 = vmatprep.subr.mxu0 0.0
    %1585 = vmatpush1.msra.mxu0 0.0
    %1586 = vmatprep.subr.mxu0 0.0
    %1587 = vmatpush1.msra.mxu0 0.0
    %1588 = vmatprep.subr.mxu0 0.0
    %1589 = vmatpush1.msra.mxu0 0.0
    %1590 = vmatprep.subr.mxu0 0.0
    %1591 = vmatpush1.msra.mxu0 0.0
    %1592 = vmatprep.subr.mxu0 0.0
    %1593 = vmatpush1.msra.mxu0 0.0
    %1594 = vmatprep.subr.mxu0 0.0
    %1595 = vmatpush1.msra.mxu0 0.0
    %1596 = vmatprep.subr.mxu0 0.0
    %1597 = vmatpush1.msra.mxu0 0.0
    %1598 = vmatprep.subr.mxu0 0.0
    %1599 = vmatpush1.msra.mxu0 0.0
    %1600 = vmatprep.subr.mxu0 0.0
    %1601 = vmatpush1.msra.mxu0 0.0
    %1602 = vmatprep.subr.mxu0 0.0
    %1603 = vmatpush1.msra.mxu0 0.0
    %1604 = vmatprep.subr.mxu0 0.0
    %1605 = vmatpush1.msra.mxu0 0.0
    %1606 = vmatprep.subr.mxu0 0.0
    %1607 = vmatpush1.msra.mxu0 0.0
    %1608 = vmatprep.subr.mxu0 0.0
    %1609 = vmatpush1.msra.mxu0 0.0
    %1610 = vmatprep.subr.mxu0 0.0
    %1611 = vmatpush1.msra.mxu0 %v1309
    %1612 = vmatprep.subr.mxu0 0.0
    %1613 = vmatpush2.msra.mxu0 0.0
    %1614 = vmatprep.subr.mxu0 0.0
    %1615 = vmatpush2.msra.mxu0 0.0
    %1616 = vmatprep.subr.mxu0 0.0
    %1617 = vmatpush2.msra.mxu0 0.0
    %1618 = vmatprep.subr.mxu0 0.0
    %1619 = vmatpush2.msra.mxu0 0.0
    %1620 = vmatprep.subr.mxu0 0.0
    %1621 = vmatpush2.msra.mxu0 0.0
    %1622 = vmatprep.subr.mxu0 0.0
    %1623 = vmatpush2.msra.mxu0 0.0
    %1624 = vmatprep.subr.mxu0 0.0
    %1625 = vmatpush2.msra.mxu0 0.0
    %1626 = vmatprep.subr.mxu0 0.0
    %1627 = vmatpush2.msra.mxu0 0.0
    %1628 = vmatprep.subr.mxu0 0.0
    %1629 = vmatpush2.msra.mxu0 0.0
    %1630 = vmatprep.subr.mxu0 0.0
    %1631 = vmatpush2.msra.mxu0 0.0
    %1632 = vmatprep.subr.mxu0 0.0
    %1633 = vmatpush2.msra.mxu0 0.0
    %1634 = vmatprep.subr.mxu0 0.0
    %1635 = vmatpush2.msra.mxu0 0.0
    %1636 = vmatprep.subr.mxu0 0.0
    %1637 = vmatpush2.msra.mxu0 0.0
    %1638 = vmatprep.subr.mxu0 0.0
    %1639 = vmatpush2.msra.mxu0 0.0
    %1640 = vmatprep.subr.mxu0 0.0
    %1641 = vmatpush2.msra.mxu0 0.0
    %1642 = vmatprep.subr.mxu0 0.0
    %1643 = vmatpush2.msra.mxu0 0.0
    %1644 = vmatprep.mubr.f32.mxu0 0.0
    %1645 = vmatmul.mubr.f32.gmra.mxu0 %v1575
    %v1646 = vpop.f32.mrf.mxu0
    %v1647 = vadd.f32 0.0, %v1646
    %v1648 = vpop.f32.mrf.mxu0
    %1649 = vmatprep.mubr.f32.mxu0 0.0
    %1650 = vmatmul.mubr.f32.gmra.mxu0 %v1578
    %v1651 = vpop.f32.mrf.mxu0
    %v1652 = vadd.f32 0.0, %v1651
    %v1653 = vpop.f32.mrf.mxu0
    %1654 = vdwg.mxu0
    %vm1655 = vcmask 261120
    %v1656 = vsel %vm1655, %v1404, 0.0
    %v1657 = vsel %vm1655, %v1485, 0.0
    %v1658 = vadd.f32 %v1656, %v1657
    %v1659 = vsel %vm1655, %v1566, 0.0
    %v1660 = vadd.f32 %v1658, %v1659
    %v1661 = vsel %vm1655, %v1647, 0.0
    %v1662 = vadd.f32 %v1660, %v1661
    %v1663 = vsel %vm1655, %v1409, 0.0
    %v1664 = vsel %vm1655, %v1490, 0.0
    %v1665 = vadd.f32 %v1663, %v1664
    %v1666 = vsel %vm1655, %v1571, 0.0
    %v1667 = vadd.f32 %v1665, %v1666
    %v1668 = vsel %vm1655, %v1652, 0.0
    %v1669 = vadd.f32 %v1667, %v1668
    %v1670 = vlaneseq
    %v1671 = vshrl.u32 %v1670, 7
    %v1672 = vsub.s32 0, %v1671
    %v1673 = vrot.slane %v1318, %v1672
    %v1674 = vadd.f32 %v1662, %v1673
    %v1675 = vadd.f32 %v1669, %v1673
    %v1676 = vadd.f32 %v1674, %v1324
    %v1677 = vadd.f32 %v1675, %v1325
    %v1678 = vsel %vm1655, %v1676, 0.0
    %1679 = vadd.xlane.f32.xlu0 %v1678
    %v1680 = vpop.xlane.xlu0 %1679
    %v1681 = vsel %vm1655, %v1677, 0.0
    %1682 = vadd.xlane.f32.xlu0 %v1681
    %v1683 = vpop.xlane.xlu0 %1682
    %v1684 = vrcp.pop 32.0
    %v1685 = vmul.f32 %v1680, %v1684
    %v1686 = vmul.f32 %v1683, %v1684
    %v1687 = vsub.f32 %v1676, %v1685
    %v1688 = vsub.f32 %v1677, %v1686
    %v1689 = vmul.f32 %v1687, %v1687
    %v1690 = vmul.f32 %v1688, %v1688
    %v1691 = vsel %vm1655, %v1689, 0.0
    %1692 = vadd.xlane.f32.xlu0 %v1691
    %v1693 = vpop.xlane.xlu0 %1692
    %v1694 = vsel %vm1655, %v1690, 0.0
    %1695 = vadd.xlane.f32.xlu0 %v1694
    %v1696 = vpop.xlane.xlu0 %1695
    %v1697 = vmul.f32 %v1693, %v1684
    %v1698 = vmul.f32 %v1696, %v1684
    %v1699 = vadd.f32 %v1697, 1e-05
    %v1700 = vadd.f32 %v1698, 1e-05
    %v1701 = vrsqrt.pop %v1699
    %v1702 = vrsqrt.pop %v1700
    %v1703 = vmul.f32 %v1687, %v1701
    %v1704 = vmul.f32 %v1688, %v1702
    %v1705 = vlaneseq
    %v1706 = vshrl.u32 %v1705, 7
    %v1707 = vsub.s32 0, %v1706
    %v1708 = vrot.slane %v1319, %v1707
    %v1709 = vmul.f32 %v1703, %v1708
    %v1710 = vmul.f32 %v1704, %v1708
    %v1711 = vlaneseq
    %v1712 = vshrl.u32 %v1711, 7
    %v1713 = vsub.s32 0, %v1712
    %v1714 = vrot.slane %v1320, %v1713
    %v1715 = vadd.f32 %v1709, %v1714
    %v1716 = vadd.f32 %v1710, %v1714
    %v1717 = vlaneseq
    %v1718 = vshrl.u32 %v1717, 7
    %v1719 = vsub.s32 0, %v1718
    %v1720 = vrot.slane %v1330, %v1719
    %v1722 = vsel %vm1655, %v1715, 0
    %v1725 = vsel %vm1655, %v1716, 0
    %1727 = vmatprep.subr.mxu0 0.0
    %1728 = vmatpush1.msra.mxu0 0.0
    %1729 = vmatprep.subr.mxu0 0.0
    %1730 = vmatpush1.msra.mxu0 0.0
    %1731 = vmatprep.subr.mxu0 0.0
    %1732 = vmatpush1.msra.mxu0 0.0
    %1733 = vmatprep.subr.mxu0 0.0
    %1734 = vmatpush1.msra.mxu0 0.0
    %1735 = vmatprep.subr.mxu0 0.0
    %1736 = vmatpush1.msra.mxu0 0.0
    %1737 = vmatprep.subr.mxu0 0.0
    %1738 = vmatpush1.msra.mxu0 0.0
    %1739 = vmatprep.subr.mxu0 0.0
    %1740 = vmatpush1.msra.mxu0 0.0
    %1741 = vmatprep.subr.mxu0 0.0
    %1742 = vmatpush1.msra.mxu0 0.0
    %1743 = vmatprep.subr.mxu0 0.0
    %1744 = vmatpush1.msra.mxu0 0.0
    %1745 = vmatprep.subr.mxu0 0.0
    %1746 = vmatpush1.msra.mxu0 0.0
    %1747 = vmatprep.subr.mxu0 0.0
    %1748 = vmatpush1.msra.mxu0 0.0
    %1749 = vmatprep.subr.mxu0 0.0
    %1750 = vmatpush1.msra.mxu0 0.0
    %1751 = vmatprep.subr.mxu0 0.0
    %1752 = vmatpush1.msra.mxu0 %v1329
    %1753 = vmatprep.subr.mxu0 0.0
    %1754 = vmatpush1.msra.mxu0 %v1328
    %1755 = vmatprep.subr.mxu0 0.0
    %1756 = vmatpush1.msra.mxu0 %v1327
    %1757 = vmatprep.subr.mxu0 0.0
    %1758 = vmatpush1.msra.mxu0 %v1326
    %1759 = vmatprep.subr.mxu0 0.0
    %1760 = vmatpush2.msra.mxu0 0.0
    %1761 = vmatprep.subr.mxu0 0.0
    %1762 = vmatpush2.msra.mxu0 0.0
    %1763 = vmatprep.subr.mxu0 0.0
    %1764 = vmatpush2.msra.mxu0 0.0
    %1765 = vmatprep.subr.mxu0 0.0
    %1766 = vmatpush2.msra.mxu0 0.0
    %1767 = vmatprep.subr.mxu0 0.0
    %1768 = vmatpush2.msra.mxu0 0.0
    %1769 = vmatprep.subr.mxu0 0.0
    %1770 = vmatpush2.msra.mxu0 0.0
    %1771 = vmatprep.subr.mxu0 0.0
    %1772 = vmatpush2.msra.mxu0 0.0
    %1773 = vmatprep.subr.mxu0 0.0
    %1774 = vmatpush2.msra.mxu0 0.0
    %1775 = vmatprep.subr.mxu0 0.0
    %1776 = vmatpush2.msra.mxu0 0.0
    %1777 = vmatprep.subr.mxu0 0.0
    %1778 = vmatpush2.msra.mxu0 0.0
    %1779 = vmatprep.subr.mxu0 0.0
    %1780 = vmatpush2.msra.mxu0 0.0
    %1781 = vmatprep.subr.mxu0 0.0
    %1782 = vmatpush2.msra.mxu0 0.0
    %1783 = vmatprep.subr.mxu0 0.0
    %1784 = vmatpush2.msra.mxu0 0.0
    %1785 = vmatprep.subr.mxu0 0.0
    %1786 = vmatpush2.msra.mxu0 0.0
    %1787 = vmatprep.subr.mxu0 0.0
    %1788 = vmatpush2.msra.mxu0 0.0
    %1789 = vmatprep.subr.mxu0 0.0
    %1790 = vmatpush2.msra.mxu0 0.0
    %1791 = vmatprep.mubr.f32.mxu0 0.0
    %1792 = vmatmul.mubr.f32.gmra.mxu0 %v1722
    %v1793 = vpop.f32.mrf.mxu0
    %v1794 = vadd.f32 %v1720, %v1793
    %v1795 = vpop.f32.mrf.mxu0
    %1796 = vmatprep.mubr.f32.mxu0 0.0
    %1797 = vmatmul.mubr.f32.gmra.mxu0 %v1725
    %v1798 = vpop.f32.mrf.mxu0
    %v1799 = vadd.f32 %v1720, %v1798
    %v1800 = vpop.f32.mrf.mxu0
    %1801 = vdwg.mxu0
    %v1802 = vmax.f32 %v1794, 0.0
    %v1803 = vmax.f32 %v1799, 0.0
    %v1804 = vlaneseq
    %v1805 = vshrl.u32 %v1804, 7
    %v1806 = vsub.s32 0, %v1805
    %v1807 = vrot.slane %v1321, %v1806
    %vm1808 = vcmask 523264
    %v1810 = vsel %vm1808, %v1802, 0
    %v1813 = vsel %vm1808, %v1803, 0
    %1815 = vmatprep.subr.mxu0 0.0
    %1816 = vmatpush1.msra.mxu0 0.0
    %1817 = vmatprep.subr.mxu0 0.0
    %1818 = vmatpush1.msra.mxu0 0.0
    %1819 = vmatprep.subr.mxu0 0.0
    %1820 = vmatpush1.msra.mxu0 0.0
    %1821 = vmatprep.subr.mxu0 0.0
    %1822 = vmatpush1.msra.mxu0 0.0
    %1823 = vmatprep.subr.mxu0 0.0
    %1824 = vmatpush1.msra.mxu0 0.0
    %1825 = vmatprep.subr.mxu0 0.0
    %1826 = vmatpush1.msra.mxu0 0.0
    %1827 = vmatprep.subr.mxu0 0.0
    %1828 = vmatpush1.msra.mxu0 0.0
    %1829 = vmatprep.subr.mxu0 0.0
    %1830 = vmatpush1.msra.mxu0 0.0
    %1831 = vmatprep.subr.mxu0 0.0
    %1832 = vmatpush1.msra.mxu0 %v1317
    %1833 = vmatprep.subr.mxu0 0.0
    %1834 = vmatpush1.msra.mxu0 %v1316
    %1835 = vmatprep.subr.mxu0 0.0
    %1836 = vmatpush1.msra.mxu0 %v1315
    %1837 = vmatprep.subr.mxu0 0.0
    %1838 = vmatpush1.msra.mxu0 %v1314
    %1839 = vmatprep.subr.mxu0 0.0
    %1840 = vmatpush1.msra.mxu0 %v1313
    %1841 = vmatprep.subr.mxu0 0.0
    %1842 = vmatpush1.msra.mxu0 %v1312
    %1843 = vmatprep.subr.mxu0 0.0
    %1844 = vmatpush1.msra.mxu0 %v1311
    %1845 = vmatprep.subr.mxu0 0.0
    %1846 = vmatpush1.msra.mxu0 %v1310
    %1847 = vmatprep.subr.mxu0 0.0
    %1848 = vmatpush2.msra.mxu0 0.0
    %1849 = vmatprep.subr.mxu0 0.0
    %1850 = vmatpush2.msra.mxu0 0.0
    %1851 = vmatprep.subr.mxu0 0.0
    %1852 = vmatpush2.msra.mxu0 0.0
    %1853 = vmatprep.subr.mxu0 0.0
    %1854 = vmatpush2.msra.mxu0 0.0
    %1855 = vmatprep.subr.mxu0 0.0
    %1856 = vmatpush2.msra.mxu0 0.0
    %1857 = vmatprep.subr.mxu0 0.0
    %1858 = vmatpush2.msra.mxu0 0.0
    %1859 = vmatprep.subr.mxu0 0.0
    %1860 = vmatpush2.msra.mxu0 0.0
    %1861 = vmatprep.subr.mxu0 0.0
    %1862 = vmatpush2.msra.mxu0 0.0
    %1863 = vmatprep.subr.mxu0 0.0
    %1864 = vmatpush2.msra.mxu0 0.0
    %1865 = vmatprep.subr.mxu0 0.0
    %1866 = vmatpush2.msra.mxu0 0.0
    %1867 = vmatprep.subr.mxu0 0.0
    %1868 = vmatpush2.msra.mxu0 0.0
    %1869 = vmatprep.subr.mxu0 0.0
    %1870 = vmatpush2.msra.mxu0 0.0
    %1871 = vmatprep.subr.mxu0 0.0
    %1872 = vmatpush2.msra.mxu0 0.0
    %1873 = vmatprep.subr.mxu0 0.0
    %1874 = vmatpush2.msra.mxu0 0.0
    %1875 = vmatprep.subr.mxu0 0.0
    %1876 = vmatpush2.msra.mxu0 0.0
    %1877 = vmatprep.subr.mxu0 0.0
    %1878 = vmatpush2.msra.mxu0 0.0
    %1879 = vmatprep.mubr.f32.mxu0 0.0
    %1880 = vmatmul.mubr.f32.gmra.mxu0 %v1810
    %v1881 = vpop.f32.mrf.mxu0
    %v1882 = vadd.f32 %v1807, %v1881
    %v1883 = vpop.f32.mrf.mxu0
    %1884 = vmatprep.mubr.f32.mxu0 0.0
    %1885 = vmatmul.mubr.f32.gmra.mxu0 %v1813
    %v1886 = vpop.f32.mrf.mxu0
    %v1887 = vadd.f32 %v1807, %v1886
    %v1888 = vpop.f32.mrf.mxu0
    %1889 = vdwg.mxu0
    %v1890 = vadd.f32 %v1882, %v1715
    %v1891 = vadd.f32 %v1887, %v1716
    %v1892 = vsel %vm1655, %v1890, 0.0
    %1893 = vadd.xlane.f32.xlu0 %v1892
    %v1894 = vpop.xlane.xlu0 %1893
    %v1895 = vsel %vm1655, %v1891, 0.0
    %1896 = vadd.xlane.f32.xlu0 %v1895
    %v1897 = vpop.xlane.xlu0 %1896
    %v1898 = vmul.f32 %v1894, %v1684
    %v1899 = vmul.f32 %v1897, %v1684
    %v1900 = vsub.f32 %v1890, %v1898
    %v1901 = vsub.f32 %v1891, %v1899
    %v1902 = vmul.f32 %v1900, %v1900
    %v1903 = vmul.f32 %v1901, %v1901
    %v1904 = vsel %vm1655, %v1902, 0.0
    %1905 = vadd.xlane.f32.xlu0 %v1904
    %v1906 = vpop.xlane.xlu0 %1905
    %v1907 = vsel %vm1655, %v1903, 0.0
    %1908 = vadd.xlane.f32.xlu0 %v1907
    %v1909 = vpop.xlane.xlu0 %1908
    %v1910 = vmul.f32 %v1906, %v1684
    %v1911 = vmul.f32 %v1909, %v1684
    %v1912 = vadd.f32 %v1910, 1e-05
    %v1913 = vadd.f32 %v1911, 1e-05
    %v1914 = vrsqrt.pop %v1912
    %v1915 = vrsqrt.pop %v1913
    %v1916 = vmul.f32 %v1900, %v1914
    %v1917 = vmul.f32 %v1901, %v1915
    %v1918 = vlaneseq
    %v1919 = vshrl.u32 %v1918, 7
    %v1920 = vsub.s32 0, %v1919
    %v1921 = vrot.slane %v1322, %v1920
    %v1922 = vmul.f32 %v1916, %v1921
    %v1923 = vmul.f32 %v1917, %v1921
    %v1924 = vlaneseq
    %v1925 = vshrl.u32 %v1924, 7
    %v1926 = vsub.s32 0, %v1925
    %v1927 = vrot.slane %v1323, %v1926
    %v1928 = vadd.f32 %v1922, %v1927
    %v1929 = vadd.f32 %v1923, %v1927
    %1930 = vst.msk [vmem:[#allocation2] sm:$0xff] %vm1655, %v1928
    %1931 = vst.msk [vmem:[#allocation2 + $0x8] sm:$0xff] %vm1655, %v1929
    // Predicated region
    $region14: #{encoder_block.1} parent=1 // pred_check
      _
    $region15: #{encoder_block.1} parent=1 // pred_check_branch
      %1933 = sbr.rel (0) target = $region17
    $region16: #{encoder_block.1} parent=1 // pred_region
      %s1935 = ssub.s32 256, 256
      %1936 = vsyncadd [#allocation3], %s1935
      %s1937 = sshll.u32 [#allocation2], 4
      %s1938 = int_to_ptr.vmem [resolvable:$true] %s1937
      %1943 = dma.vmem_to_hbm [thread:$0]  %s1938, 256, %s3, [#allocation3], 128, 128, 8
    $region17: #{encoder_block.1} parent=1 // pred_fallthru
      _
    // Predicated region
    $region18: #{encoder_block.1} parent=1 // pred_check
      _
    $region19: #{encoder_block.1} parent=1 // pred_check_branch
      %1945 = sbr.rel (0) target = $region21
    $region20: #{encoder_block.1} parent=1 // pred_region
      %1946 = dma.done [#allocation3], 256
    $region21: #{encoder_block.1} parent=1 // pred_fallthru
      _
    %1947 = vsyncpa [#allocation3], 1

</llo_original>
